<compile_context>
chip_gen: v5e
topology: v5e:2x2
jax: 0.10.0
libtpu: 0.0.40
codegen_flags: <defaults>
</compile_context>

<pallas_src>
import functools

import jax
import jax.numpy as jnp
import numpy as np
from jax.experimental import pallas as pl
from jax.experimental.pallas import tpu as pltpu

NEG_SLOPE = 0.01
BN_EPS = 1e-5


def _round_up(x, m):
    return (x + m - 1) // m * m


def _stacked_conv_kernel(x_ref, w_ref, b_ref, o_ref, xpad_ref,
                         *, L, H, KH, WC, ROW0, HP):
    """All L fused Conv3x3(+folded BN) + LeakyReLU blocks for one image.

    Row layout: one row = one image row, with W*cpack channels packed in lanes.
      x_ref:    (1, H, WC)       input rows (real channels, zero slots to cpack)
      w_ref:    (L, KH, WC, WC)  banded, BN-folded conv weights (one per kh tap)
      b_ref:    (L, 1, WC)       BN-folded bias, tiled across W positions
      o_ref:    (1, H, WC)       output rows of the last block
      xpad_ref: (HP, WC)         VMEM scratch; interior rows [ROW0, ROW0+H),
                                 zero halo rows above/below (sublane aligned).
    """
    ph = KH // 2

    # Zero only the halo strips (aligned 8-row stores), then place the image.
    xpad_ref[0:ROW0, :] = jnp.zeros((ROW0, WC), xpad_ref.dtype)
    if HP > ROW0 + H:
        xpad_ref[ROW0 + H:HP, :] = jnp.zeros((HP - ROW0 - H, WC), xpad_ref.dtype)
    xpad_ref[ROW0:ROW0 + H, :] = x_ref[0]

    y = None
    for layer in range(L):                       # static unroll; L is small
        acc = jnp.zeros((H, WC), jnp.float32)
        for kh in range(KH):                     # KH banded matmuls, K = WC
            lhs = xpad_ref[ROW0 - ph + kh:ROW0 - ph + kh + H, :]
            acc = acc + jnp.dot(lhs, w_ref[layer, kh],
                                preferred_element_type=jnp.float32,
                                precision=jax.lax.Precision.HIGHEST)
        y = acc + b_ref[layer]                   # conv bias with BN folded in
        y = jnp.where(y >= 0, y, NEG_SLOPE * y)  # LeakyReLU(0.01)

        if layer + 1 < L:
            # Intermediate stays in VMEM: aligned, unmasked interior store.
            xpad_ref[ROW0:ROW0 + H, :] = y

    o_ref[...] = y.reshape(1, H, WC).astype(o_ref.dtype)


def prepare_kernel_params(raw_params, in_ch, out_ch, width):
    """Fold BatchNorm (eval) into the conv weights/bias and repack each layer's
    3x3 kernel as KH banded (W*cpack, W*cpack) matrices, so the kw sweep and
    the W-boundary zero padding are absorbed into a single matmul per kh."""
    cpack = max(in_ch, out_ch)                   # channel slots per W position
    WC = width * cpack

    ws, bs = [], []
    cin = in_ch
    for p in raw_params:
        gamma = np.asarray(p["gamma"])
        var = np.asarray(p["running_var"])
        mean = np.asarray(p["running_mean"])
        beta = np.asarray(p["beta"])
        scale = gamma / np.sqrt(var + BN_EPS)
        shift = beta - mean * scale
        # y = ((x*w + b) * scale) + shift == x*(w*scale) + (b*scale + shift)
        w = np.asarray(p["w_oihw"]) * scale[:, None, None, None]  # (O,I,KH,KW)
        b = np.asarray(p["b"]) * scale + shift                    # (O,)

        KH, KW = int(w.shape[2]), int(w.shape[3])
        w_hwio = np.transpose(w, (2, 3, 1, 0))                    # (KH,KW,I,O)

        band = np.zeros((KH, WC, WC), np.float32)
        for kh in range(KH):
            for w_out in range(width):
                for kw in range(KW):
                    w_in = w_out + kw - KW // 2
                    if 0 <= w_in < width:
                        band[kh,
                             w_in * cpack:w_in * cpack + cin,
                             w_out * cpack:w_out * cpack + out_ch] = \
                            w_hwio[kh, kw, :cin, :out_ch]
        ws.append(band)

        b_row = np.zeros((WC,), np.float32)
        for w_out in range(width):
            b_row[w_out * cpack:w_out * cpack + out_ch] = b
        bs.append(b_row.reshape(1, WC))
        cin = out_ch

    # (L, KH, W*cpack, W*cpack), (L, 1, W*cpack)
    return jnp.asarray(np.stack(ws)), jnp.asarray(np.stack(bs))


@functools.partial(jax.jit, static_argnums=(3,))
def stacked_conv_layers(x_nchw, w_stack, b_stack, out_ch):
    """Forward pass of StackedConvLayers. Input/output are NCHW like PyTorch."""
    N, in_ch, H, W = x_nchw.shape
    L, KH, WC, _ = w_stack.shape
    cpack = WC // W
    ph = KH // 2

    # Boundary layout change only: NCHW -> (N, H, W*cpack) lane-packed rows.
    x = jnp.transpose(x_nchw, (0, 2, 3, 1))                        # NHWC
    x = jnp.pad(x, ((0, 0), (0, 0), (0, 0), (0, cpack - in_ch)))   # tiny pad
    x = x.reshape(N, H, WC)

    ROW0 = _round_up(max(ph, 1), 8)              # sublane-aligned interior row
    HP = _round_up(ROW0 + H + (KH - 1 - ph), 8)  # scratch rows (incl. halos)

    kernel = functools.partial(_stacked_conv_kernel,
                               L=L, H=H, KH=KH, WC=WC, ROW0=ROW0, HP=HP)

    out = pl.pallas_call(
        kernel,
        out_shape=jax.ShapeDtypeStruct((N, H, WC), x.dtype),
        grid_spec=pltpu.PrefetchScalarGridSpec(
            num_scalar_prefetch=0,
            grid=(N,),
            in_specs=[
                pl.BlockSpec((1, H, WC), lambda n: (n, 0, 0)),
                pl.BlockSpec((L, KH, WC, WC), lambda n: (0, 0, 0, 0)),
                pl.BlockSpec((L, 1, WC), lambda n: (0, 0, 0)),
            ],
            out_specs=pl.BlockSpec((1, H, WC), lambda n: (n, 0, 0)),
            scratch_shapes=[pltpu.VMEM((HP, WC), jnp.float32)],
        ),
        compiler_params=pltpu.CompilerParams(
            dimension_semantics=("parallel",),   # feeds both v7x TensorCores
        ),
    )(x, w_stack, b_stack)

    # Output is already lane-dense and unpadded (cpack == out_ch here).
    out = out.reshape(N, H, W, cpack)[..., :out_ch]
    return jnp.transpose(out, (0, 3, 1, 2))      # -> NCHW


def init_params(key, in_ch, out_ch, num_convs):
    """Deterministic synthetic parameters mirroring the PyTorch module."""
    params = []
    cin = in_ch
    for _ in range(num_convs):
        key, k1, k2, k3, k4, k5, k6 = jax.random.split(key, 7)
        params.append(dict(
            w_oihw=0.1 * jax.random.normal(k1, (out_ch, cin, 3, 3), jnp.float32),
            b=0.1 * jax.random.normal(k2, (out_ch,), jnp.float32),
            gamma=1.0 + 0.1 * jax.random.normal(k3, (out_ch,), jnp.float32),
            beta=0.1 * jax.random.normal(k4, (out_ch,), jnp.float32),
            running_mean=0.1 * jax.random.normal(k5, (out_ch,), jnp.float32),
            running_var=jnp.abs(
                1.0 + 0.1 * jax.random.normal(k6, (out_ch,), jnp.float32)),
        ))
        cin = out_ch
    return params


def _reference(x_nchw, raw_params):
    """Pure-JAX reference (unfolded conv + BN eval + LeakyReLU)."""
    x = x_nchw
    for p in raw_params:
        x = jax.lax.conv_general_dilated(
            x, p["w_oihw"], window_strides=(1, 1), padding=((1, 1), (1, 1)),
            dimension_numbers=("NCHW", "OIHW", "NCHW"),
            precision=jax.lax.Precision.HIGHEST)
        x = x + p["b"].reshape(1, -1, 1, 1)
        scale = p["gamma"] / jnp.sqrt(p["running_var"] + BN_EPS)
        shift = p["beta"] - p["running_mean"] * scale
        x = x * scale.reshape(1, -1, 1, 1) + shift.reshape(1, -1, 1, 1)
        x = jnp.where(x >= 0, x, NEG_SLOPE * x)
    return x


if __name__ == "__main__":
    key = jax.random.PRNGKey(0)
    key, kx, kp = jax.random.split(key, 3)

    # StackedConvLayers(input_feature_channels=4, output_feature_channels=8,
    #                   num_convs=2) with default conv/norm/nonlin kwargs.
    N, Cin, H, W = 2, 4, 16, 16
    Cout, num_convs = 8, 2

    x = jax.random.normal(kx, (N, Cin, H, W), jnp.float32)
    raw_params = init_params(kp, Cin, Cout, num_convs)
    w_stack, b_stack = prepare_kernel_params(raw_params, Cin, Cout, W)

    out = stacked_conv_layers(x, w_stack, b_stack, Cout)
    out = jax.block_until_ready(out)

    ref = jax.block_until_ready(_reference(x, raw_params))
    np.testing.assert_allclose(np.asarray(out), np.asarray(ref),
                               rtol=1e-4, atol=1e-4)
    assert out.shape == (N, Cout, H, W)
    print("KERNEL_OK")
</pallas_src>

<mosaic_0001>
module attributes {stable_mosaic.version = 11 : i64} {
  func.func @_stacked_conv_kernel(%arg0: i32, %arg1: memref<1x16x128xf32, #tpu.memory_space<vmem>>, %arg2: memref<2x3x128x128xf32, #tpu.memory_space<vmem>>, %arg3: memref<2x1x128xf32, #tpu.memory_space<vmem>>, %arg4: memref<1x16x128xf32, #tpu.memory_space<vmem>>, %arg5: memref<32x128xf32, #tpu.memory_space<vmem>>) attributes {dimension_semantics = [#tpu.dimension_semantics<parallel>], iteration_bounds = array<i64: 2>, scalar_prefetch = 0 : i64, scratch_operands = 1 : i64, tpu.core_type = #tpu.core_type<tc>, window_params = [{transform_indices = @transform_0, window_bounds = array<i64: 1, 16, 128>}, {pipeline_mode = #tpu.pipeline_mode<synchronous>, transform_indices = @transform_1, window_bounds = array<i64: 2, 3, 128, 128>}, {pipeline_mode = #tpu.pipeline_mode<synchronous>, transform_indices = @transform_2, window_bounds = array<i64: 2, 1, 128>}, {transform_indices = @transform_3, window_bounds = array<i64: 1, 16, 128>}]} {
    %cst = arith.constant 0.000000e+00 : f32
    %0 = vector.broadcast %cst : f32 to vector<8x128xf32>
    %c0 = arith.constant 0 : index
    %c0_0 = arith.constant 0 : index
    %1 = vector.load %arg5[%c0, %c0_0] : memref<32x128xf32, #tpu.memory_space<vmem>>, vector<8x128xf32>
    tpu.vector_store %arg5[%c0, %c0_0], %0 {strides = array<i32>} : memref<32x128xf32, #tpu.memory_space<vmem>>, vector<8x128xf32>,
    %cst_1 = arith.constant 0.000000e+00 : f32
    %2 = vector.broadcast %cst_1 : f32 to vector<8x128xf32>
    %c24 = arith.constant 24 : index
    %c0_2 = arith.constant 0 : index
    %3 = vector.load %arg5[%c24, %c0_2] : memref<32x128xf32, #tpu.memory_space<vmem>>, vector<8x128xf32>
    tpu.vector_store %arg5[%c24, %c0_2], %2 {strides = array<i32>} : memref<32x128xf32, #tpu.memory_space<vmem>>, vector<8x128xf32>,
    %c0_3 = arith.constant 0 : index
    %c0_4 = arith.constant 0 : index
    %c0_5 = arith.constant 0 : index
    %4 = vector.load %arg1[%c0_3, %c0_4, %c0_5] : memref<1x16x128xf32, #tpu.memory_space<vmem>>, vector<1x16x128xf32>
    %5 = vector.shape_cast %4 : vector<1x16x128xf32> to vector<16x128xf32>
    %c8 = arith.constant 8 : index
    %c0_6 = arith.constant 0 : index
    %6 = vector.load %arg5[%c8, %c0_6] : memref<32x128xf32, #tpu.memory_space<vmem>>, vector<16x128xf32>
    tpu.vector_store %arg5[%c8, %c0_6], %5 {strides = array<i32>} : memref<32x128xf32, #tpu.memory_space<vmem>>, vector<16x128xf32>,
    %cst_7 = arith.constant 0.000000e+00 : f32
    %7 = vector.broadcast %cst_7 : f32 to vector<16x128xf32>
    %c7 = arith.constant 7 : index
    %c0_8 = arith.constant 0 : index
    %8 = vector.load %arg5[%c7, %c0_8] : memref<32x128xf32, #tpu.memory_space<vmem>>, vector<16x128xf32>
    %c0_9 = arith.constant 0 : index
    %c0_10 = arith.constant 0 : index
    %c0_11 = arith.constant 0 : index
    %c0_12 = arith.constant 0 : index
    %9 = vector.load %arg2[%c0_9, %c0_10, %c0_11, %c0_12] : memref<2x3x128x128xf32, #tpu.memory_space<vmem>>, vector<1x1x128x128xf32>
    %10 = vector.shape_cast %9 : vector<1x1x128x128xf32> to vector<128x128xf32>
    %cst_13 = arith.constant dense<0.000000e+00> : vector<16x128xf32>
    %11 = tpu.matmul %8, %10, %cst_13 {dimension_numbers = #tpu.dot_dimension_numbers<[1], [0], [0], [1], [0, 0, 1, 1], [], []>, precision = #tpu.contract_precision<fp32>} : vector<16x128xf32>, vector<128x128xf32>, vector<16x128xf32> -> vector<16x128xf32>
    %12 = arith.addf %7, %11 : vector<16x128xf32>
    %c8_14 = arith.constant 8 : index
    %c0_15 = arith.constant 0 : index
    %13 = vector.load %arg5[%c8_14, %c0_15] : memref<32x128xf32, #tpu.memory_space<vmem>>, vector<16x128xf32>
    %c0_16 = arith.constant 0 : index
    %c1 = arith.constant 1 : index
    %c0_17 = arith.constant 0 : index
    %c0_18 = arith.constant 0 : index
    %14 = vector.load %arg2[%c0_16, %c1, %c0_17, %c0_18] : memref<2x3x128x128xf32, #tpu.memory_space<vmem>>, vector<1x1x128x128xf32>
    %15 = vector.shape_cast %14 : vector<1x1x128x128xf32> to vector<128x128xf32>
    %cst_19 = arith.constant dense<0.000000e+00> : vector<16x128xf32>
    %16 = tpu.matmul %13, %15, %cst_19 {dimension_numbers = #tpu.dot_dimension_numbers<[1], [0], [0], [1], [0, 0, 1, 1], [], []>, precision = #tpu.contract_precision<fp32>} : vector<16x128xf32>, vector<128x128xf32>, vector<16x128xf32> -> vector<16x128xf32>
    %17 = arith.addf %12, %16 : vector<16x128xf32>
    %c9 = arith.constant 9 : index
    %c0_20 = arith.constant 0 : index
    %18 = vector.load %arg5[%c9, %c0_20] : memref<32x128xf32, #tpu.memory_space<vmem>>, vector<16x128xf32>
    %c0_21 = arith.constant 0 : index
    %c2 = arith.constant 2 : index
    %c0_22 = arith.constant 0 : index
    %c0_23 = arith.constant 0 : index
    %19 = vector.load %arg2[%c0_21, %c2, %c0_22, %c0_23] : memref<2x3x128x128xf32, #tpu.memory_space<vmem>>, vector<1x1x128x128xf32>
    %20 = vector.shape_cast %19 : vector<1x1x128x128xf32> to vector<128x128xf32>
    %cst_24 = arith.constant dense<0.000000e+00> : vector<16x128xf32>
    %21 = tpu.matmul %18, %20, %cst_24 {dimension_numbers = #tpu.dot_dimension_numbers<[1], [0], [0], [1], [0, 0, 1, 1], [], []>, precision = #tpu.contract_precision<fp32>} : vector<16x128xf32>, vector<128x128xf32>, vector<16x128xf32> -> vector<16x128xf32>
    %22 = arith.addf %17, %21 : vector<16x128xf32>
    %c0_25 = arith.constant 0 : index
    %c0_26 = arith.constant 0 : index
    %c0_27 = arith.constant 0 : index
    %23 = vector.load %arg3[%c0_25, %c0_26, %c0_27] : memref<2x1x128xf32, #tpu.memory_space<vmem>>, vector<1x1x128xf32>
    %24 = vector.shape_cast %23 : vector<1x1x128xf32> to vector<1x128xf32>
    %25 = vector.broadcast %24 : vector<1x128xf32> to vector<16x128xf32>
    %26 = arith.addf %22, %25 : vector<16x128xf32>
    %cst_28 = arith.constant 0.000000e+00 : f32
    %27 = vector.broadcast %cst_28 : f32 to vector<16x128xf32>
    %28 = arith.cmpf oge, %26, %27 : vector<16x128xf32>
    %cst_29 = arith.constant 0.00999999977 : f32
    %29 = vector.broadcast %cst_29 : f32 to vector<16x128xf32>
    %30 = arith.mulf %29, %26 : vector<16x128xf32>
    %31 = arith.select %28, %26, %30 : vector<16x128xi1>, vector<16x128xf32>
    %c8_30 = arith.constant 8 : index
    %c0_31 = arith.constant 0 : index
    %32 = vector.load %arg5[%c8_30, %c0_31] : memref<32x128xf32, #tpu.memory_space<vmem>>, vector<16x128xf32>
    tpu.vector_store %arg5[%c8_30, %c0_31], %31 {strides = array<i32>} : memref<32x128xf32, #tpu.memory_space<vmem>>, vector<16x128xf32>,
    %cst_32 = arith.constant 0.000000e+00 : f32
    %33 = vector.broadcast %cst_32 : f32 to vector<16x128xf32>
    %c7_33 = arith.constant 7 : index
    %c0_34 = arith.constant 0 : index
    %34 = vector.load %arg5[%c7_33, %c0_34] : memref<32x128xf32, #tpu.memory_space<vmem>>, vector<16x128xf32>
    %c1_35 = arith.constant 1 : index
    %c0_36 = arith.constant 0 : index
    %c0_37 = arith.constant 0 : index
    %c0_38 = arith.constant 0 : index
    %35 = vector.load %arg2[%c1_35, %c0_36, %c0_37, %c0_38] : memref<2x3x128x128xf32, #tpu.memory_space<vmem>>, vector<1x1x128x128xf32>
    %36 = vector.shape_cast %35 : vector<1x1x128x128xf32> to vector<128x128xf32>
    %cst_39 = arith.constant dense<0.000000e+00> : vector<16x128xf32>
    %37 = tpu.matmul %34, %36, %cst_39 {dimension_numbers = #tpu.dot_dimension_numbers<[1], [0], [0], [1], [0, 0, 1, 1], [], []>, precision = #tpu.contract_precision<fp32>} : vector<16x128xf32>, vector<128x128xf32>, vector<16x128xf32> -> vector<16x128xf32>
    %38 = arith.addf %33, %37 : vector<16x128xf32>
    %c8_40 = arith.constant 8 : index
    %c0_41 = arith.constant 0 : index
    %39 = vector.load %arg5[%c8_40, %c0_41] : memref<32x128xf32, #tpu.memory_space<vmem>>, vector<16x128xf32>
    %c1_42 = arith.constant 1 : index
    %c1_43 = arith.constant 1 : index
    %c0_44 = arith.constant 0 : index
    %c0_45 = arith.constant 0 : index
    %40 = vector.load %arg2[%c1_42, %c1_43, %c0_44, %c0_45] : memref<2x3x128x128xf32, #tpu.memory_space<vmem>>, vector<1x1x128x128xf32>
    %41 = vector.shape_cast %40 : vector<1x1x128x128xf32> to vector<128x128xf32>
    %cst_46 = arith.constant dense<0.000000e+00> : vector<16x128xf32>
    %42 = tpu.matmul %39, %41, %cst_46 {dimension_numbers = #tpu.dot_dimension_numbers<[1], [0], [0], [1], [0, 0, 1, 1], [], []>, precision = #tpu.contract_precision<fp32>} : vector<16x128xf32>, vector<128x128xf32>, vector<16x128xf32> -> vector<16x128xf32>
    %43 = arith.addf %38, %42 : vector<16x128xf32>
    %c9_47 = arith.constant 9 : index
    %c0_48 = arith.constant 0 : index
    %44 = vector.load %arg5[%c9_47, %c0_48] : memref<32x128xf32, #tpu.memory_space<vmem>>, vector<16x128xf32>
    %c1_49 = arith.constant 1 : index
    %c2_50 = arith.constant 2 : index
    %c0_51 = arith.constant 0 : index
    %c0_52 = arith.constant 0 : index
    %45 = vector.load %arg2[%c1_49, %c2_50, %c0_51, %c0_52] : memref<2x3x128x128xf32, #tpu.memory_space<vmem>>, vector<1x1x128x128xf32>
    %46 = vector.shape_cast %45 : vector<1x1x128x128xf32> to vector<128x128xf32>
    %cst_53 = arith.constant dense<0.000000e+00> : vector<16x128xf32>
    %47 = tpu.matmul %44, %46, %cst_53 {dimension_numbers = #tpu.dot_dimension_numbers<[1], [0], [0], [1], [0, 0, 1, 1], [], []>, precision = #tpu.contract_precision<fp32>} : vector<16x128xf32>, vector<128x128xf32>, vector<16x128xf32> -> vector<16x128xf32>
    %48 = arith.addf %43, %47 : vector<16x128xf32>
    %c1_54 = arith.constant 1 : index
    %c0_55 = arith.constant 0 : index
    %c0_56 = arith.constant 0 : index
    %49 = vector.load %arg3[%c1_54, %c0_55, %c0_56] : memref<2x1x128xf32, #tpu.memory_space<vmem>>, vector<1x1x128xf32>
    %50 = vector.shape_cast %49 : vector<1x1x128xf32> to vector<1x128xf32>
    %51 = vector.broadcast %50 : vector<1x128xf32> to vector<16x128xf32>
    %52 = arith.addf %48, %51 : vector<16x128xf32>
    %cst_57 = arith.constant 0.000000e+00 : f32
    %53 = vector.broadcast %cst_57 : f32 to vector<16x128xf32>
    %54 = arith.cmpf oge, %52, %53 : vector<16x128xf32>
    %cst_58 = arith.constant 0.00999999977 : f32
    %55 = vector.broadcast %cst_58 : f32 to vector<16x128xf32>
    %56 = arith.mulf %55, %52 : vector<16x128xf32>
    %57 = arith.select %54, %52, %56 : vector<16x128xi1>, vector<16x128xf32>
    %58 = vector.shape_cast %57 : vector<16x128xf32> to vector<1x16x128xf32>
    %c0_59 = arith.constant 0 : index
    %c0_60 = arith.constant 0 : index
    %c0_61 = arith.constant 0 : index
    %59 = vector.load %arg4[%c0_59, %c0_60, %c0_61] : memref<1x16x128xf32, #tpu.memory_space<vmem>>, vector<1x16x128xf32>
    tpu.vector_store %arg4[%c0_59, %c0_60, %c0_61], %58 {strides = array<i32>} : memref<1x16x128xf32, #tpu.memory_space<vmem>>, vector<1x16x128xf32>,
    return
  }
  func.func @transform_0(%arg0: i32) -> (i32, i32, i32) {
    %c0_i32 = arith.constant 0 : i32
    %c0_i32_0 = arith.constant 0 : i32
    %c0_i32_1 = arith.constant 0 : i32
    return %arg0, %c0_i32, %c0_i32_0 : i32, i32, i32
  }
  func.func @transform_1(%arg0: i32) -> (i32, i32, i32, i32) {
    %c0_i32 = arith.constant 0 : i32
    %c0_i32_0 = arith.constant 0 : i32
    %c0_i32_1 = arith.constant 0 : i32
    %c0_i32_2 = arith.constant 0 : i32
    %c0_i32_3 = arith.constant 0 : i32
    return %c0_i32, %c0_i32_0, %c0_i32_1, %c0_i32_2 : i32, i32, i32, i32
  }
  func.func @transform_2(%arg0: i32) -> (i32, i32, i32) {
    %c0_i32 = arith.constant 0 : i32
    %c0_i32_0 = arith.constant 0 : i32
    %c0_i32_1 = arith.constant 0 : i32
    %c0_i32_2 = arith.constant 0 : i32
    return %c0_i32, %c0_i32_0, %c0_i32_1 : i32, i32, i32
  }
  func.func @transform_3(%arg0: i32) -> (i32, i32, i32) {
    %c0_i32 = arith.constant 0 : i32
    %c0_i32_0 = arith.constant 0 : i32
    %c0_i32_1 = arith.constant 0 : i32
    return %arg0, %c0_i32, %c0_i32_0 : i32, i32, i32
  }
}

</mosaic_0001>

<llo_original>
// kernel: stacked_conv_layers.1
$region0: #{stacked_conv_layers.1}
  #allocation0 [shape = 'u32[]', space=smem, size = 0x4, offset = 0x4, fixed_abs, tag = 'smem constant byte address 0x4 - core index']
  #allocation1 [shape = 'u32[72,128]{1,0:T(1,128)}', space=vmem, size = 0x9000, scoped, tag = 'internal scratch']
  #allocation2 [shape = 'f32[32,128]{1,0:T(8,128)}', space=vmem, size = 0x4000, scoped, tag = 'scratch operand']
  %s0 = inlined_call_operand.vmem [shape: f32[2,16,128], index: 0, kind: input, shape index: {}]
  %s1 = inlined_call_operand.vmem [shape: f32[2,3,128,128], index: 1, kind: input, shape index: {}]
  %s2 = inlined_call_operand.vmem [shape: f32[2,1,128], index: 2, kind: input, shape index: {}]
  %s3 = inlined_call_operand.vmem [shape: f32[2,16,128], index: 3, kind: output, shape index: {}]
  %s4 = sld [smem:[#allocation0]]
  $region45: #{stacked_conv_layers.1} parent=0
    _
  %s6 = ssub.s32 1, %s4
  %s7 = scalar_select 0, %s6, %s4
  loop: start=0, step=1, limit=4
  $region2: #{stacked_conv_layers.1} parent=0 // loop_pre_header
    _
  $region3: #{stacked_conv_layers.1} parent=0 // loop_header
    %s9 = sphi 0, %s13
    %p10 = scmp.ge.s32.totalorder %s9, 4
    %s19 = sphi 0, %s21
    %s22 = sphi 0, %s19
    %s23 = sphi 0, %s22
    %s39 = sphi 0, %s23
    %s43 = sphi 0, %s43
    %s45 = sphi 0, %s43
    %s46 = sphi 0, %s45
    %s60 = sphi 0, %s46
    %s64 = sphi 0, %s64
    %s66 = sphi 0, %s64
    %s67 = sphi 0, %s66
    %s81 = sphi 0, %s67
    %s87 = sphi 0, %s89
    %s90 = sphi 0, %s87
    %s91 = sphi 0, %s90
    %s107 = sphi 0, %s91
  $region4: #{stacked_conv_layers.1} parent=0 // loop_header_branch
    %12 = sbr.rel (%p10) target = $region8
  $region5: #{stacked_conv_layers.1} parent=0 // loop_body
    %s14 = ssub.s32 %s9, 1
    %s15 = ssub.s32 %s9, 2
    %s16 = sadd.s32 %s9, 1
    %s17 = ssub.s32 %s9, %s16
    %p18 = scmp.eq.s32.totalorder %s17, 0
    %s20 = sadd.s32 %s19, 1
    %s21 = scalar_select %p18, %s19, %s20
    %p24 = pneg %p18
    %p25 = scmp.eq.s32.totalorder %s9, 1
    %p26 = por %p24, %p25
    %p27 = scmp.ne.s32.totalorder %s19, %s22
    %p28 = scmp.eq.s32.totalorder %s9, 0
    %p29 = por %p27, %p28
    %p30 = scmp.ne.s32.totalorder %s19, %s22
    %p31 = scmp.eq.s32.totalorder %s14, 1
    %p32 = por %p30, %p31
    %p33 = scmp.ne.s32.totalorder %s22, %s23
    %p34 = scmp.eq.s32.totalorder %s14, 0
    %p35 = por %p33, %p34
    %p36 = scmp.ne.s32.totalorder %s22, %s23
    %p37 = scmp.eq.s32.totalorder %s15, 1
    %p38 = por %p36, %p37
    %p40 = scmp.ne.s32.totalorder %s23, %s39
    %p41 = scmp.eq.s32.totalorder %s15, 0
    %p42 = por %p40, %p41
    %s44 = sadd.s32 %s43, 1
    %p47 = scmp.eq.s32.totalorder %s9, 1
    %p48 = scmp.ne.s32.totalorder %s43, %s45
    %p49 = scmp.eq.s32.totalorder %s9, 0
    %p50 = por %p48, %p49
    %p51 = scmp.ne.s32.totalorder %s43, %s45
    %p52 = scmp.eq.s32.totalorder %s14, 1
    %p53 = por %p51, %p52
    %p54 = scmp.ne.s32.totalorder %s45, %s46
    %p55 = scmp.eq.s32.totalorder %s14, 0
    %p56 = por %p54, %p55
    %p57 = scmp.ne.s32.totalorder %s45, %s46
    %p58 = scmp.eq.s32.totalorder %s15, 1
    %p59 = por %p57, %p58
    %p61 = scmp.ne.s32.totalorder %s46, %s60
    %p62 = scmp.eq.s32.totalorder %s15, 0
    %p63 = por %p61, %p62
    %s65 = sadd.s32 %s64, 1
    %p68 = scmp.eq.s32.totalorder %s9, 1
    %p69 = scmp.ne.s32.totalorder %s64, %s66
    %p70 = scmp.eq.s32.totalorder %s9, 0
    %p71 = por %p69, %p70
    %p72 = scmp.ne.s32.totalorder %s64, %s66
    %p73 = scmp.eq.s32.totalorder %s14, 1
    %p74 = por %p72, %p73
    %p75 = scmp.ne.s32.totalorder %s66, %s67
    %p76 = scmp.eq.s32.totalorder %s14, 0
    %p77 = por %p75, %p76
    %p78 = scmp.ne.s32.totalorder %s66, %s67
    %p79 = scmp.eq.s32.totalorder %s15, 1
    %p80 = por %p78, %p79
    %p82 = scmp.ne.s32.totalorder %s67, %s81
    %p83 = scmp.eq.s32.totalorder %s15, 0
    %p84 = por %p82, %p83
    %s85 = ssub.s32 %s9, %s16
    %p86 = scmp.eq.s32.totalorder %s85, 0
    %s88 = sadd.s32 %s87, 1
    %s89 = scalar_select %p86, %s87, %s88
    %p92 = pneg %p86
    %p93 = scmp.eq.s32.totalorder %s9, 1
    %p94 = por %p92, %p93
    %p95 = scmp.ne.s32.totalorder %s87, %s90
    %p96 = scmp.eq.s32.totalorder %s9, 0
    %p97 = por %p95, %p96
    %p98 = scmp.ne.s32.totalorder %s87, %s90
    %p99 = scmp.eq.s32.totalorder %s14, 1
    %p100 = por %p98, %p99
    %p101 = scmp.ne.s32.totalorder %s90, %s91
    %p102 = scmp.eq.s32.totalorder %s14, 0
    %p103 = por %p101, %p102
    %p104 = scmp.ne.s32.totalorder %s90, %s91
    %p105 = scmp.eq.s32.totalorder %s15, 1
    %p106 = por %p104, %p105
    %p108 = scmp.ne.s32.totalorder %s91, %s107
    %p109 = scmp.eq.s32.totalorder %s15, 0
    %p110 = por %p108, %p109
    %p111 = scmp.le.s32.totalorder 1, %s9
    %p112 = scmp.lt.s32.totalorder %s9, 3
    %p113 = pnand %p111, %p112
    %p114 = pneg %p113
    // Predicated region
    $region9: #{stacked_conv_layers.1} parent=5 // pred_check
      _
    $region10: #{stacked_conv_layers.1} parent=5 // pred_check_branch
      %116 = sbr.rel (%p113) target = $region12
    $region11: #{stacked_conv_layers.1} parent=5 // pred_region
      %s117 = ssub.s32 %s9, 1
      // Predicated region
      $region13: #{stacked_conv_layers.1} parent=11 // pred_check
        %p118 = pneg %p56
      $region14: #{stacked_conv_layers.1} parent=11 // pred_check_branch
        %120 = sbr.rel (%p118) target = $region16
      $region15: #{stacked_conv_layers.1} parent=11 // pred_region
        _
      $region16: #{stacked_conv_layers.1} parent=11 // pred_fallthru
        _
      // Predicated region
      $region17: #{stacked_conv_layers.1} parent=11 // pred_check
        %p121 = pneg %p77
      $region18: #{stacked_conv_layers.1} parent=11 // pred_check_branch
        %123 = sbr.rel (%p121) target = $region20
      $region19: #{stacked_conv_layers.1} parent=11 // pred_region
        _
      $region20: #{stacked_conv_layers.1} parent=11 // pred_fallthru
        _
    $region12: #{stacked_conv_layers.1} parent=5 // pred_fallthru
      _
    %p124 = scmp.lt.s32.totalorder %s9, 2
    // Predicated region
    $region21: #{stacked_conv_layers.1} parent=5 // pred_check
      %p125 = pneg %p124
    $region22: #{stacked_conv_layers.1} parent=5 // pred_check_branch
      %127 = sbr.rel (%p125) target = $region24
    $region23: #{stacked_conv_layers.1} parent=5 // pred_region
      // Predicated region
      $region25: #{stacked_conv_layers.1} parent=23 // pred_check
        %p128 = pneg %p29
      $region26: #{stacked_conv_layers.1} parent=23 // pred_check_branch
        %130 = sbr.rel (%p128) target = $region28
      $region27: #{stacked_conv_layers.1} parent=23 // pred_region
        %p131 = scmp.lt.s32.totalorder %s9, 1
        %s132 = scalar_select %p131, %s9, 1
        %s133 = smul.addr %s132, 2
        %s134 = smul.addr %s133, 8
        %s135 = scalar_lea.vmem %s0, %s134
      $region28: #{stacked_conv_layers.1} parent=23 // pred_fallthru
        _
    $region24: #{stacked_conv_layers.1} parent=5 // pred_fallthru
      _
    %p136 = scmp.le.s32.totalorder 1, %s9
    %p137 = scmp.lt.s32.totalorder %s9, 3
    %p138 = pnand %p136, %p137
    %p139 = pneg %p138
    // Predicated region
    $region29: #{stacked_conv_layers.1} parent=5 // pred_check
      _
    $region30: #{stacked_conv_layers.1} parent=5 // pred_check_branch
      %141 = sbr.rel (%p138) target = $region32
    $region31: #{stacked_conv_layers.1} parent=5 // pred_region
      %s142 = ssub.s32 %s9, 1
      %p143 = scmp.lt.s32.totalorder %s14, 1
      %s144 = scalar_select %p143, %s14, 1
      %s145 = smul.addr %s144, 2
      %s146 = smul.addr %s145, 8
      %s147 = scalar_lea.vmem %s0, %s146
      %p148 = pneg %p35
      %p149 = pneg %p32
      %p150 = pneg %p56
      %p151 = pneg %p53
      %p152 = pneg %p77
      %p153 = pneg %p74
      %p154 = pneg %p103
      %p155 = pneg %p100
      %p156 = scmp.lt.s32.totalorder %s14, 1
      %s157 = scalar_select %p156, %s14, 1
      %s158 = smul.addr %s157, 2
      %s159 = smul.addr %s158, 8
      %s160 = scalar_lea.vmem %s3, %s159
      %p161 = scmp.lt.s32.totalorder %s14, 1
      %s162 = scalar_select %p161, %s14, 1
      %s163 = smul.addr %s162, 2
      %s164 = smul.addr %s163, 8
      %s165 = scalar_lea.vmem %s0, %s164
      %p166 = scmp.lt.s32.totalorder %s14, 1
      %s167 = scalar_select %p166, %s14, 1
      %s168 = smul.addr %s167, 2
      %s169 = smul.addr %s168, 8
      %s170 = scalar_lea.vmem %s3, %s169
      %171 = vst [vmem:[#allocation2] sm:$0xff] 0.0
      %172 = vst [vmem:[#allocation2 + $0x18] sm:$0xff] 0.0
      %v173 = vld [vmem:[%s165] sm:$0xff]
      %v174 = vld [vmem:[%s165 + $0x8] sm:$0xff]
      %175 = vst [vmem:[#allocation2 + $0x8] sm:$0xff] %v173
      %176 = vst [vmem:[#allocation2 + $0x10] sm:$0xff] %v174
      %v177 = vld [vmem:[#allocation2 + $0x7] sm:$0xff]
      %v178 = vld [vmem:[#allocation2 + $0xf] sm:$0xff]
      %v179 = vld [vmem:[%s1] sm:$0xff]
      %v180 = vld [vmem:[%s1 + $0x8] sm:$0xff]
      %v181 = vld [vmem:[%s1 + $0x10] sm:$0xff]
      %v182 = vld [vmem:[%s1 + $0x18] sm:$0xff]
      %v183 = vld [vmem:[%s1 + $0x20] sm:$0xff]
      %v184 = vld [vmem:[%s1 + $0x28] sm:$0xff]
      %v185 = vld [vmem:[%s1 + $0x30] sm:$0xff]
      %v186 = vld [vmem:[%s1 + $0x38] sm:$0xff]
      %v187 = vld [vmem:[%s1 + $0x40] sm:$0xff]
      %v188 = vld [vmem:[%s1 + $0x48] sm:$0xff]
      %v189 = vld [vmem:[%s1 + $0x50] sm:$0xff]
      %v190 = vld [vmem:[%s1 + $0x58] sm:$0xff]
      %v191 = vld [vmem:[%s1 + $0x60] sm:$0xff]
      %v192 = vld [vmem:[%s1 + $0x68] sm:$0xff]
      %v193 = vld [vmem:[%s1 + $0x70] sm:$0xff]
      %v194 = vld [vmem:[%s1 + $0x78] sm:$0xff]
      %v195 = vld [vmem:[#allocation2 + $0x8] sm:$0xff]
      %v196 = vld [vmem:[#allocation2 + $0x10] sm:$0xff]
      %s197 = scalar_lea.vmem %s1, 128
      %v198 = vld [vmem:[%s197] sm:$0xff]
      %v199 = vld [vmem:[%s197 + $0x8] sm:$0xff]
      %v200 = vld [vmem:[%s197 + $0x10] sm:$0xff]
      %v201 = vld [vmem:[%s197 + $0x18] sm:$0xff]
      %v202 = vld [vmem:[%s197 + $0x20] sm:$0xff]
      %v203 = vld [vmem:[%s197 + $0x28] sm:$0xff]
      %v204 = vld [vmem:[%s197 + $0x30] sm:$0xff]
      %v205 = vld [vmem:[%s197 + $0x38] sm:$0xff]
      %v206 = vld [vmem:[%s197 + $0x40] sm:$0xff]
      %v207 = vld [vmem:[%s197 + $0x48] sm:$0xff]
      %v208 = vld [vmem:[%s197 + $0x50] sm:$0xff]
      %v209 = vld [vmem:[%s197 + $0x58] sm:$0xff]
      %v210 = vld [vmem:[%s197 + $0x60] sm:$0xff]
      %v211 = vld [vmem:[%s197 + $0x68] sm:$0xff]
      %v212 = vld [vmem:[%s197 + $0x70] sm:$0xff]
      %v213 = vld [vmem:[%s197 + $0x78] sm:$0xff]
      %v214 = vand.u32 %v213, 4294901760
      %215 = vmatpush.msra.mxu0 %v214
      %v216 = vand.u32 %v212, 4294901760
      %217 = vmatpush.msra.mxu0 %v216
      %v218 = vand.u32 %v211, 4294901760
      %219 = vmatpush.msra.mxu0 %v218
      %v220 = vand.u32 %v210, 4294901760
      %221 = vmatpush.msra.mxu0 %v220
      %v222 = vand.u32 %v209, 4294901760
      %223 = vmatpush.msra.mxu0 %v222
      %v224 = vand.u32 %v208, 4294901760
      %225 = vmatpush.msra.mxu0 %v224
      %v226 = vand.u32 %v207, 4294901760
      %227 = vmatpush.msra.mxu0 %v226
      %v228 = vand.u32 %v206, 4294901760
      %229 = vmatpush.msra.mxu0 %v228
      %v230 = vand.u32 %v205, 4294901760
      %231 = vmatpush.msra.mxu0 %v230
      %v232 = vand.u32 %v204, 4294901760
      %233 = vmatpush.msra.mxu0 %v232
      %v234 = vand.u32 %v203, 4294901760
      %235 = vmatpush.msra.mxu0 %v234
      %v236 = vand.u32 %v202, 4294901760
      %237 = vmatpush.msra.mxu0 %v236
      %v238 = vand.u32 %v201, 4294901760
      %239 = vmatpush.msra.mxu0 %v238
      %v240 = vand.u32 %v200, 4294901760
      %241 = vmatpush.msra.mxu0 %v240
      %v242 = vand.u32 %v199, 4294901760
      %243 = vmatpush.msra.mxu0 %v242
      %v244 = vand.u32 %v198, 4294901760
      %245 = vmatpush.msra.mxu0 %v244
      %v246 = vand.u32 %v195, 4294901760
      %v247 = vsub.f32 %v195, %v246
      %v248 = vand.u32 %v247, 4294901760
      %v249 = vsub.f32 %v247, %v248
      %v250 = vand.u32 %v249, 4294901760
      %251 = vmatmul.f32.gmra.mxu0 %v250
      %v252 = vpop.f32.mrf.mxu0
      %v253 = vadd.f32 0.0, %v252
      %v254 = vand.u32 %v196, 4294901760
      %v255 = vsub.f32 %v196, %v254
      %v256 = vand.u32 %v255, 4294901760
      %v257 = vsub.f32 %v255, %v256
      %v258 = vand.u32 %v257, 4294901760
      %259 = vmatmul.f32.gmra.mxu0 %v258
      %v260 = vpop.f32.mrf.mxu0
      %v261 = vadd.f32 0.0, %v260
      %262 = vdwg.mxu0
      %v263 = vand.u32 %v213, 4294901760
      %v264 = vsub.f32 %v213, %v263
      %v265 = vand.u32 %v264, 4294901760
      %v266 = vsub.f32 %v264, %v265
      %v267 = vand.u32 %v266, 4294901760
      %268 = vmatpush.msra.mxu0 %v267
      %v269 = vand.u32 %v212, 4294901760
      %v270 = vsub.f32 %v212, %v269
      %v271 = vand.u32 %v270, 4294901760
      %v272 = vsub.f32 %v270, %v271
      %v273 = vand.u32 %v272, 4294901760
      %274 = vmatpush.msra.mxu0 %v273
      %v275 = vand.u32 %v211, 4294901760
      %v276 = vsub.f32 %v211, %v275
      %v277 = vand.u32 %v276, 4294901760
      %v278 = vsub.f32 %v276, %v277
      %v279 = vand.u32 %v278, 4294901760
      %280 = vmatpush.msra.mxu0 %v279
      %v281 = vand.u32 %v210, 4294901760
      %v282 = vsub.f32 %v210, %v281
      %v283 = vand.u32 %v282, 4294901760
      %v284 = vsub.f32 %v282, %v283
      %v285 = vand.u32 %v284, 4294901760
      %286 = vmatpush.msra.mxu0 %v285
      %v287 = vand.u32 %v209, 4294901760
      %v288 = vsub.f32 %v209, %v287
      %v289 = vand.u32 %v288, 4294901760
      %v290 = vsub.f32 %v288, %v289
      %v291 = vand.u32 %v290, 4294901760
      %292 = vmatpush.msra.mxu0 %v291
      %v293 = vand.u32 %v208, 4294901760
      %v294 = vsub.f32 %v208, %v293
      %v295 = vand.u32 %v294, 4294901760
      %v296 = vsub.f32 %v294, %v295
      %v297 = vand.u32 %v296, 4294901760
      %298 = vmatpush.msra.mxu0 %v297
      %v299 = vand.u32 %v207, 4294901760
      %v300 = vsub.f32 %v207, %v299
      %v301 = vand.u32 %v300, 4294901760
      %v302 = vsub.f32 %v300, %v301
      %v303 = vand.u32 %v302, 4294901760
      %304 = vmatpush.msra.mxu0 %v303
      %v305 = vand.u32 %v206, 4294901760
      %v306 = vsub.f32 %v206, %v305
      %v307 = vand.u32 %v306, 4294901760
      %v308 = vsub.f32 %v306, %v307
      %v309 = vand.u32 %v308, 4294901760
      %310 = vmatpush.msra.mxu0 %v309
      %v311 = vand.u32 %v205, 4294901760
      %v312 = vsub.f32 %v205, %v311
      %v313 = vand.u32 %v312, 4294901760
      %v314 = vsub.f32 %v312, %v313
      %v315 = vand.u32 %v314, 4294901760
      %316 = vmatpush.msra.mxu0 %v315
      %v317 = vand.u32 %v204, 4294901760
      %v318 = vsub.f32 %v204, %v317
      %v319 = vand.u32 %v318, 4294901760
      %v320 = vsub.f32 %v318, %v319
      %v321 = vand.u32 %v320, 4294901760
      %322 = vmatpush.msra.mxu0 %v321
      %v323 = vand.u32 %v203, 4294901760
      %v324 = vsub.f32 %v203, %v323
      %v325 = vand.u32 %v324, 4294901760
      %v326 = vsub.f32 %v324, %v325
      %v327 = vand.u32 %v326, 4294901760
      %328 = vmatpush.msra.mxu0 %v327
      %v329 = vand.u32 %v202, 4294901760
      %v330 = vsub.f32 %v202, %v329
      %v331 = vand.u32 %v330, 4294901760
      %v332 = vsub.f32 %v330, %v331
      %v333 = vand.u32 %v332, 4294901760
      %334 = vmatpush.msra.mxu0 %v333
      %v335 = vand.u32 %v201, 4294901760
      %v336 = vsub.f32 %v201, %v335
      %v337 = vand.u32 %v336, 4294901760
      %v338 = vsub.f32 %v336, %v337
      %v339 = vand.u32 %v338, 4294901760
      %340 = vmatpush.msra.mxu0 %v339
      %v341 = vand.u32 %v200, 4294901760
      %v342 = vsub.f32 %v200, %v341
      %v343 = vand.u32 %v342, 4294901760
      %v344 = vsub.f32 %v342, %v343
      %v345 = vand.u32 %v344, 4294901760
      %346 = vmatpush.msra.mxu0 %v345
      %v347 = vand.u32 %v199, 4294901760
      %v348 = vsub.f32 %v199, %v347
      %v349 = vand.u32 %v348, 4294901760
      %v350 = vsub.f32 %v348, %v349
      %v351 = vand.u32 %v350, 4294901760
      %352 = vmatpush.msra.mxu0 %v351
      %v353 = vand.u32 %v198, 4294901760
      %v354 = vsub.f32 %v198, %v353
      %v355 = vand.u32 %v354, 4294901760
      %v356 = vsub.f32 %v354, %v355
      %v357 = vand.u32 %v356, 4294901760
      %358 = vmatpush.msra.mxu0 %v357
      %v359 = vand.u32 %v195, 4294901760
      %360 = vmatmul.f32.gmra.mxu0 %v359
      %v361 = vpop.f32.mrf.mxu0
      %v362 = vadd.f32 %v253, %v361
      %v363 = vand.u32 %v196, 4294901760
      %364 = vmatmul.f32.gmra.mxu0 %v363
      %v365 = vpop.f32.mrf.mxu0
      %v366 = vadd.f32 %v261, %v365
      %367 = vdwg.mxu0
      %v368 = vand.u32 %v213, 4294901760
      %v369 = vsub.f32 %v213, %v368
      %370 = vmatpush.msra.mxu0 %v369
      %v371 = vand.u32 %v212, 4294901760
      %v372 = vsub.f32 %v212, %v371
      %373 = vmatpush.msra.mxu0 %v372
      %v374 = vand.u32 %v211, 4294901760
      %v375 = vsub.f32 %v211, %v374
      %376 = vmatpush.msra.mxu0 %v375
      %v377 = vand.u32 %v210, 4294901760
      %v378 = vsub.f32 %v210, %v377
      %379 = vmatpush.msra.mxu0 %v378
      %v380 = vand.u32 %v209, 4294901760
      %v381 = vsub.f32 %v209, %v380
      %382 = vmatpush.msra.mxu0 %v381
      %v383 = vand.u32 %v208, 4294901760
      %v384 = vsub.f32 %v208, %v383
      %385 = vmatpush.msra.mxu0 %v384
      %v386 = vand.u32 %v207, 4294901760
      %v387 = vsub.f32 %v207, %v386
      %388 = vmatpush.msra.mxu0 %v387
      %v389 = vand.u32 %v206, 4294901760
      %v390 = vsub.f32 %v206, %v389
      %391 = vmatpush.msra.mxu0 %v390
      %v392 = vand.u32 %v205, 4294901760
      %v393 = vsub.f32 %v205, %v392
      %394 = vmatpush.msra.mxu0 %v393
      %v395 = vand.u32 %v204, 4294901760
      %v396 = vsub.f32 %v204, %v395
      %397 = vmatpush.msra.mxu0 %v396
      %v398 = vand.u32 %v203, 4294901760
      %v399 = vsub.f32 %v203, %v398
      %400 = vmatpush.msra.mxu0 %v399
      %v401 = vand.u32 %v202, 4294901760
      %v402 = vsub.f32 %v202, %v401
      %403 = vmatpush.msra.mxu0 %v402
      %v404 = vand.u32 %v201, 4294901760
      %v405 = vsub.f32 %v201, %v404
      %406 = vmatpush.msra.mxu0 %v405
      %v407 = vand.u32 %v200, 4294901760
      %v408 = vsub.f32 %v200, %v407
      %409 = vmatpush.msra.mxu0 %v408
      %v410 = vand.u32 %v199, 4294901760
      %v411 = vsub.f32 %v199, %v410
      %412 = vmatpush.msra.mxu0 %v411
      %v413 = vand.u32 %v198, 4294901760
      %v414 = vsub.f32 %v198, %v413
      %415 = vmatpush.msra.mxu0 %v414
      %v416 = vand.u32 %v195, 4294901760
      %v417 = vsub.f32 %v195, %v416
      %418 = vmatmul.f32.gmra.mxu0 %v417
      %v419 = vpop.f32.mrf.mxu0
      %v420 = vadd.f32 %v362, %v419
      %v421 = vand.u32 %v196, 4294901760
      %v422 = vsub.f32 %v196, %v421
      %423 = vmatmul.f32.gmra.mxu0 %v422
      %v424 = vpop.f32.mrf.mxu0
      %v425 = vadd.f32 %v366, %v424
      %426 = vdwg.mxu0
      %v427 = vand.u32 %v213, 4294901760
      %428 = vmatpush.msra.mxu0 %v427
      %v429 = vand.u32 %v212, 4294901760
      %430 = vmatpush.msra.mxu0 %v429
      %v431 = vand.u32 %v211, 4294901760
      %432 = vmatpush.msra.mxu0 %v431
      %v433 = vand.u32 %v210, 4294901760
      %434 = vmatpush.msra.mxu0 %v433
      %v435 = vand.u32 %v209, 4294901760
      %436 = vmatpush.msra.mxu0 %v435
      %v437 = vand.u32 %v208, 4294901760
      %438 = vmatpush.msra.mxu0 %v437
      %v439 = vand.u32 %v207, 4294901760
      %440 = vmatpush.msra.mxu0 %v439
      %v441 = vand.u32 %v206, 4294901760
      %442 = vmatpush.msra.mxu0 %v441
      %v443 = vand.u32 %v205, 4294901760
      %444 = vmatpush.msra.mxu0 %v443
      %v445 = vand.u32 %v204, 4294901760
      %446 = vmatpush.msra.mxu0 %v445
      %v447 = vand.u32 %v203, 4294901760
      %448 = vmatpush.msra.mxu0 %v447
      %v449 = vand.u32 %v202, 4294901760
      %450 = vmatpush.msra.mxu0 %v449
      %v451 = vand.u32 %v201, 4294901760
      %452 = vmatpush.msra.mxu0 %v451
      %v453 = vand.u32 %v200, 4294901760
      %454 = vmatpush.msra.mxu0 %v453
      %v455 = vand.u32 %v199, 4294901760
      %456 = vmatpush.msra.mxu0 %v455
      %v457 = vand.u32 %v198, 4294901760
      %458 = vmatpush.msra.mxu0 %v457
      %v459 = vand.u32 %v195, 4294901760
      %v460 = vsub.f32 %v195, %v459
      %v461 = vand.u32 %v460, 4294901760
      %462 = vmatmul.f32.gmra.mxu0 %v461
      %v463 = vpop.f32.mrf.mxu0
      %v464 = vadd.f32 %v420, %v463
      %v465 = vand.u32 %v196, 4294901760
      %v466 = vsub.f32 %v196, %v465
      %v467 = vand.u32 %v466, 4294901760
      %468 = vmatmul.f32.gmra.mxu0 %v467
      %v469 = vpop.f32.mrf.mxu0
      %v470 = vadd.f32 %v425, %v469
      %471 = vdwg.mxu0
      %v472 = vand.u32 %v213, 4294901760
      %v473 = vsub.f32 %v213, %v472
      %v474 = vand.u32 %v473, 4294901760
      %475 = vmatpush.msra.mxu0 %v474
      %v476 = vand.u32 %v212, 4294901760
      %v477 = vsub.f32 %v212, %v476
      %v478 = vand.u32 %v477, 4294901760
      %479 = vmatpush.msra.mxu0 %v478
      %v480 = vand.u32 %v211, 4294901760
      %v481 = vsub.f32 %v211, %v480
      %v482 = vand.u32 %v481, 4294901760
      %483 = vmatpush.msra.mxu0 %v482
      %v484 = vand.u32 %v210, 4294901760
      %v485 = vsub.f32 %v210, %v484
      %v486 = vand.u32 %v485, 4294901760
      %487 = vmatpush.msra.mxu0 %v486
      %v488 = vand.u32 %v209, 4294901760
      %v489 = vsub.f32 %v209, %v488
      %v490 = vand.u32 %v489, 4294901760
      %491 = vmatpush.msra.mxu0 %v490
      %v492 = vand.u32 %v208, 4294901760
      %v493 = vsub.f32 %v208, %v492
      %v494 = vand.u32 %v493, 4294901760
      %495 = vmatpush.msra.mxu0 %v494
      %v496 = vand.u32 %v207, 4294901760
      %v497 = vsub.f32 %v207, %v496
      %v498 = vand.u32 %v497, 4294901760
      %499 = vmatpush.msra.mxu0 %v498
      %v500 = vand.u32 %v206, 4294901760
      %v501 = vsub.f32 %v206, %v500
      %v502 = vand.u32 %v501, 4294901760
      %503 = vmatpush.msra.mxu0 %v502
      %v504 = vand.u32 %v205, 4294901760
      %v505 = vsub.f32 %v205, %v504
      %v506 = vand.u32 %v505, 4294901760
      %507 = vmatpush.msra.mxu0 %v506
      %v508 = vand.u32 %v204, 4294901760
      %v509 = vsub.f32 %v204, %v508
      %v510 = vand.u32 %v509, 4294901760
      %511 = vmatpush.msra.mxu0 %v510
      %v512 = vand.u32 %v203, 4294901760
      %v513 = vsub.f32 %v203, %v512
      %v514 = vand.u32 %v513, 4294901760
      %515 = vmatpush.msra.mxu0 %v514
      %v516 = vand.u32 %v202, 4294901760
      %v517 = vsub.f32 %v202, %v516
      %v518 = vand.u32 %v517, 4294901760
      %519 = vmatpush.msra.mxu0 %v518
      %v520 = vand.u32 %v201, 4294901760
      %v521 = vsub.f32 %v201, %v520
      %v522 = vand.u32 %v521, 4294901760
      %523 = vmatpush.msra.mxu0 %v522
      %v524 = vand.u32 %v200, 4294901760
      %v525 = vsub.f32 %v200, %v524
      %v526 = vand.u32 %v525, 4294901760
      %527 = vmatpush.msra.mxu0 %v526
      %v528 = vand.u32 %v199, 4294901760
      %v529 = vsub.f32 %v199, %v528
      %v530 = vand.u32 %v529, 4294901760
      %531 = vmatpush.msra.mxu0 %v530
      %v532 = vand.u32 %v198, 4294901760
      %v533 = vsub.f32 %v198, %v532
      %v534 = vand.u32 %v533, 4294901760
      %535 = vmatpush.msra.mxu0 %v534
      %v536 = vand.u32 %v195, 4294901760
      %537 = vmatmul.f32.gmra.mxu0 %v536
      %v538 = vpop.f32.mrf.mxu0
      %v539 = vadd.f32 %v464, %v538
      %v540 = vand.u32 %v196, 4294901760
      %541 = vmatmul.f32.gmra.mxu0 %v540
      %v542 = vpop.f32.mrf.mxu0
      %v543 = vadd.f32 %v470, %v542
      %544 = vdwg.mxu0
      %v545 = vand.u32 %v213, 4294901760
      %546 = vmatpush.msra.mxu0 %v545
      %v547 = vand.u32 %v212, 4294901760
      %548 = vmatpush.msra.mxu0 %v547
      %v549 = vand.u32 %v211, 4294901760
      %550 = vmatpush.msra.mxu0 %v549
      %v551 = vand.u32 %v210, 4294901760
      %552 = vmatpush.msra.mxu0 %v551
      %v553 = vand.u32 %v209, 4294901760
      %554 = vmatpush.msra.mxu0 %v553
      %v555 = vand.u32 %v208, 4294901760
      %556 = vmatpush.msra.mxu0 %v555
      %v557 = vand.u32 %v207, 4294901760
      %558 = vmatpush.msra.mxu0 %v557
      %v559 = vand.u32 %v206, 4294901760
      %560 = vmatpush.msra.mxu0 %v559
      %v561 = vand.u32 %v205, 4294901760
      %562 = vmatpush.msra.mxu0 %v561
      %v563 = vand.u32 %v204, 4294901760
      %564 = vmatpush.msra.mxu0 %v563
      %v565 = vand.u32 %v203, 4294901760
      %566 = vmatpush.msra.mxu0 %v565
      %v567 = vand.u32 %v202, 4294901760
      %568 = vmatpush.msra.mxu0 %v567
      %v569 = vand.u32 %v201, 4294901760
      %570 = vmatpush.msra.mxu0 %v569
      %v571 = vand.u32 %v200, 4294901760
      %572 = vmatpush.msra.mxu0 %v571
      %v573 = vand.u32 %v199, 4294901760
      %574 = vmatpush.msra.mxu0 %v573
      %v575 = vand.u32 %v198, 4294901760
      %576 = vmatpush.msra.mxu0 %v575
      %v577 = vand.u32 %v195, 4294901760
      %578 = vmatmul.f32.gmra.mxu0 %v577
      %v579 = vpop.f32.mrf.mxu0
      %v580 = vadd.f32 %v539, %v579
      %v581 = vand.u32 %v196, 4294901760
      %582 = vmatmul.f32.gmra.mxu0 %v581
      %v583 = vpop.f32.mrf.mxu0
      %v584 = vadd.f32 %v543, %v583
      %585 = vdwg.mxu0
      %v586 = vand.u32 %v194, 4294901760
      %587 = vmatpush.msra.mxu0 %v586
      %v588 = vand.u32 %v193, 4294901760
      %589 = vmatpush.msra.mxu0 %v588
      %v590 = vand.u32 %v192, 4294901760
      %591 = vmatpush.msra.mxu0 %v590
      %v592 = vand.u32 %v191, 4294901760
      %593 = vmatpush.msra.mxu0 %v592
      %v594 = vand.u32 %v190, 4294901760
      %595 = vmatpush.msra.mxu0 %v594
      %v596 = vand.u32 %v189, 4294901760
      %597 = vmatpush.msra.mxu0 %v596
      %v598 = vand.u32 %v188, 4294901760
      %599 = vmatpush.msra.mxu0 %v598
      %v600 = vand.u32 %v187, 4294901760
      %601 = vmatpush.msra.mxu0 %v600
      %v602 = vand.u32 %v186, 4294901760
      %603 = vmatpush.msra.mxu0 %v602
      %v604 = vand.u32 %v185, 4294901760
      %605 = vmatpush.msra.mxu0 %v604
      %v606 = vand.u32 %v184, 4294901760
      %607 = vmatpush.msra.mxu0 %v606
      %v608 = vand.u32 %v183, 4294901760
      %609 = vmatpush.msra.mxu0 %v608
      %v610 = vand.u32 %v182, 4294901760
      %611 = vmatpush.msra.mxu0 %v610
      %v612 = vand.u32 %v181, 4294901760
      %613 = vmatpush.msra.mxu0 %v612
      %v614 = vand.u32 %v180, 4294901760
      %615 = vmatpush.msra.mxu0 %v614
      %v616 = vand.u32 %v179, 4294901760
      %617 = vmatpush.msra.mxu0 %v616
      %v618 = vand.u32 %v177, 4294901760
      %v619 = vsub.f32 %v177, %v618
      %v620 = vand.u32 %v619, 4294901760
      %v621 = vsub.f32 %v619, %v620
      %v622 = vand.u32 %v621, 4294901760
      %623 = vmatmul.f32.gmra.mxu0 %v622
      %v624 = vpop.f32.mrf.mxu0
      %v625 = vadd.f32 %v580, %v624
      %v626 = vand.u32 %v178, 4294901760
      %v627 = vsub.f32 %v178, %v626
      %v628 = vand.u32 %v627, 4294901760
      %v629 = vsub.f32 %v627, %v628
      %v630 = vand.u32 %v629, 4294901760
      %631 = vmatmul.f32.gmra.mxu0 %v630
      %v632 = vpop.f32.mrf.mxu0
      %v633 = vadd.f32 %v584, %v632
      %634 = vdwg.mxu0
      %v635 = vand.u32 %v194, 4294901760
      %v636 = vsub.f32 %v194, %v635
      %v637 = vand.u32 %v636, 4294901760
      %v638 = vsub.f32 %v636, %v637
      %v639 = vand.u32 %v638, 4294901760
      %640 = vmatpush.msra.mxu0 %v639
      %v641 = vand.u32 %v193, 4294901760
      %v642 = vsub.f32 %v193, %v641
      %v643 = vand.u32 %v642, 4294901760
      %v644 = vsub.f32 %v642, %v643
      %v645 = vand.u32 %v644, 4294901760
      %646 = vmatpush.msra.mxu0 %v645
      %v647 = vand.u32 %v192, 4294901760
      %v648 = vsub.f32 %v192, %v647
      %v649 = vand.u32 %v648, 4294901760
      %v650 = vsub.f32 %v648, %v649
      %v651 = vand.u32 %v650, 4294901760
      %652 = vmatpush.msra.mxu0 %v651
      %v653 = vand.u32 %v191, 4294901760
      %v654 = vsub.f32 %v191, %v653
      %v655 = vand.u32 %v654, 4294901760
      %v656 = vsub.f32 %v654, %v655
      %v657 = vand.u32 %v656, 4294901760
      %658 = vmatpush.msra.mxu0 %v657
      %v659 = vand.u32 %v190, 4294901760
      %v660 = vsub.f32 %v190, %v659
      %v661 = vand.u32 %v660, 4294901760
      %v662 = vsub.f32 %v660, %v661
      %v663 = vand.u32 %v662, 4294901760
      %664 = vmatpush.msra.mxu0 %v663
      %v665 = vand.u32 %v189, 4294901760
      %v666 = vsub.f32 %v189, %v665
      %v667 = vand.u32 %v666, 4294901760
      %v668 = vsub.f32 %v666, %v667
      %v669 = vand.u32 %v668, 4294901760
      %670 = vmatpush.msra.mxu0 %v669
      %v671 = vand.u32 %v188, 4294901760
      %v672 = vsub.f32 %v188, %v671
      %v673 = vand.u32 %v672, 4294901760
      %v674 = vsub.f32 %v672, %v673
      %v675 = vand.u32 %v674, 4294901760
      %676 = vmatpush.msra.mxu0 %v675
      %v677 = vand.u32 %v187, 4294901760
      %v678 = vsub.f32 %v187, %v677
      %v679 = vand.u32 %v678, 4294901760
      %v680 = vsub.f32 %v678, %v679
      %v681 = vand.u32 %v680, 4294901760
      %682 = vmatpush.msra.mxu0 %v681
      %v683 = vand.u32 %v186, 4294901760
      %v684 = vsub.f32 %v186, %v683
      %v685 = vand.u32 %v684, 4294901760
      %v686 = vsub.f32 %v684, %v685
      %v687 = vand.u32 %v686, 4294901760
      %688 = vmatpush.msra.mxu0 %v687
      %v689 = vand.u32 %v185, 4294901760
      %v690 = vsub.f32 %v185, %v689
      %v691 = vand.u32 %v690, 4294901760
      %v692 = vsub.f32 %v690, %v691
      %v693 = vand.u32 %v692, 4294901760
      %694 = vmatpush.msra.mxu0 %v693
      %v695 = vand.u32 %v184, 4294901760
      %v696 = vsub.f32 %v184, %v695
      %v697 = vand.u32 %v696, 4294901760
      %v698 = vsub.f32 %v696, %v697
      %v699 = vand.u32 %v698, 4294901760
      %700 = vmatpush.msra.mxu0 %v699
      %v701 = vand.u32 %v183, 4294901760
      %v702 = vsub.f32 %v183, %v701
      %v703 = vand.u32 %v702, 4294901760
      %v704 = vsub.f32 %v702, %v703
      %v705 = vand.u32 %v704, 4294901760
      %706 = vmatpush.msra.mxu0 %v705
      %v707 = vand.u32 %v182, 4294901760
      %v708 = vsub.f32 %v182, %v707
      %v709 = vand.u32 %v708, 4294901760
      %v710 = vsub.f32 %v708, %v709
      %v711 = vand.u32 %v710, 4294901760
      %712 = vmatpush.msra.mxu0 %v711
      %v713 = vand.u32 %v181, 4294901760
      %v714 = vsub.f32 %v181, %v713
      %v715 = vand.u32 %v714, 4294901760
      %v716 = vsub.f32 %v714, %v715
      %v717 = vand.u32 %v716, 4294901760
      %718 = vmatpush.msra.mxu0 %v717
      %v719 = vand.u32 %v180, 4294901760
      %v720 = vsub.f32 %v180, %v719
      %v721 = vand.u32 %v720, 4294901760
      %v722 = vsub.f32 %v720, %v721
      %v723 = vand.u32 %v722, 4294901760
      %724 = vmatpush.msra.mxu0 %v723
      %v725 = vand.u32 %v179, 4294901760
      %v726 = vsub.f32 %v179, %v725
      %v727 = vand.u32 %v726, 4294901760
      %v728 = vsub.f32 %v726, %v727
      %v729 = vand.u32 %v728, 4294901760
      %730 = vmatpush.msra.mxu0 %v729
      %v731 = vand.u32 %v177, 4294901760
      %732 = vmatmul.f32.gmra.mxu0 %v731
      %v733 = vpop.f32.mrf.mxu0
      %v734 = vadd.f32 %v625, %v733
      %v735 = vand.u32 %v178, 4294901760
      %736 = vmatmul.f32.gmra.mxu0 %v735
      %v737 = vpop.f32.mrf.mxu0
      %v738 = vadd.f32 %v633, %v737
      %739 = vdwg.mxu0
      %v740 = vand.u32 %v194, 4294901760
      %v741 = vsub.f32 %v194, %v740
      %742 = vmatpush.msra.mxu0 %v741
      %v743 = vand.u32 %v193, 4294901760
      %v744 = vsub.f32 %v193, %v743
      %745 = vmatpush.msra.mxu0 %v744
      %v746 = vand.u32 %v192, 4294901760
      %v747 = vsub.f32 %v192, %v746
      %748 = vmatpush.msra.mxu0 %v747
      %v749 = vand.u32 %v191, 4294901760
      %v750 = vsub.f32 %v191, %v749
      %751 = vmatpush.msra.mxu0 %v750
      %v752 = vand.u32 %v190, 4294901760
      %v753 = vsub.f32 %v190, %v752
      %754 = vmatpush.msra.mxu0 %v753
      %v755 = vand.u32 %v189, 4294901760
      %v756 = vsub.f32 %v189, %v755
      %757 = vmatpush.msra.mxu0 %v756
      %v758 = vand.u32 %v188, 4294901760
      %v759 = vsub.f32 %v188, %v758
      %760 = vmatpush.msra.mxu0 %v759
      %v761 = vand.u32 %v187, 4294901760
      %v762 = vsub.f32 %v187, %v761
      %763 = vmatpush.msra.mxu0 %v762
      %v764 = vand.u32 %v186, 4294901760
      %v765 = vsub.f32 %v186, %v764
      %766 = vmatpush.msra.mxu0 %v765
      %v767 = vand.u32 %v185, 4294901760
      %v768 = vsub.f32 %v185, %v767
      %769 = vmatpush.msra.mxu0 %v768
      %v770 = vand.u32 %v184, 4294901760
      %v771 = vsub.f32 %v184, %v770
      %772 = vmatpush.msra.mxu0 %v771
      %v773 = vand.u32 %v183, 4294901760
      %v774 = vsub.f32 %v183, %v773
      %775 = vmatpush.msra.mxu0 %v774
      %v776 = vand.u32 %v182, 4294901760
      %v777 = vsub.f32 %v182, %v776
      %778 = vmatpush.msra.mxu0 %v777
      %v779 = vand.u32 %v181, 4294901760
      %v780 = vsub.f32 %v181, %v779
      %781 = vmatpush.msra.mxu0 %v780
      %v782 = vand.u32 %v180, 4294901760
      %v783 = vsub.f32 %v180, %v782
      %784 = vmatpush.msra.mxu0 %v783
      %v785 = vand.u32 %v179, 4294901760
      %v786 = vsub.f32 %v179, %v785
      %787 = vmatpush.msra.mxu0 %v786
      %v788 = vand.u32 %v177, 4294901760
      %v789 = vsub.f32 %v177, %v788
      %790 = vmatmul.f32.gmra.mxu0 %v789
      %v791 = vpop.f32.mrf.mxu0
      %v792 = vadd.f32 %v734, %v791
      %v793 = vand.u32 %v178, 4294901760
      %v794 = vsub.f32 %v178, %v793
      %795 = vmatmul.f32.gmra.mxu0 %v794
      %v796 = vpop.f32.mrf.mxu0
      %v797 = vadd.f32 %v738, %v796
      %798 = vdwg.mxu0
      %v799 = vand.u32 %v194, 4294901760
      %800 = vmatpush.msra.mxu0 %v799
      %v801 = vand.u32 %v193, 4294901760
      %802 = vmatpush.msra.mxu0 %v801
      %v803 = vand.u32 %v192, 4294901760
      %804 = vmatpush.msra.mxu0 %v803
      %v805 = vand.u32 %v191, 4294901760
      %806 = vmatpush.msra.mxu0 %v805
      %v807 = vand.u32 %v190, 4294901760
      %808 = vmatpush.msra.mxu0 %v807
      %v809 = vand.u32 %v189, 4294901760
      %810 = vmatpush.msra.mxu0 %v809
      %v811 = vand.u32 %v188, 4294901760
      %812 = vmatpush.msra.mxu0 %v811
      %v813 = vand.u32 %v187, 4294901760
      %814 = vmatpush.msra.mxu0 %v813
      %v815 = vand.u32 %v186, 4294901760
      %816 = vmatpush.msra.mxu0 %v815
      %v817 = vand.u32 %v185, 4294901760
      %818 = vmatpush.msra.mxu0 %v817
      %v819 = vand.u32 %v184, 4294901760
      %820 = vmatpush.msra.mxu0 %v819
      %v821 = vand.u32 %v183, 4294901760
      %822 = vmatpush.msra.mxu0 %v821
      %v823 = vand.u32 %v182, 4294901760
      %824 = vmatpush.msra.mxu0 %v823
      %v825 = vand.u32 %v181, 4294901760
      %826 = vmatpush.msra.mxu0 %v825
      %v827 = vand.u32 %v180, 4294901760
      %828 = vmatpush.msra.mxu0 %v827
      %v829 = vand.u32 %v179, 4294901760
      %830 = vmatpush.msra.mxu0 %v829
      %v831 = vand.u32 %v177, 4294901760
      %v832 = vsub.f32 %v177, %v831
      %v833 = vand.u32 %v832, 4294901760
      %834 = vmatmul.f32.gmra.mxu0 %v833
      %v835 = vpop.f32.mrf.mxu0
      %v836 = vadd.f32 %v792, %v835
      %v837 = vand.u32 %v178, 4294901760
      %v838 = vsub.f32 %v178, %v837
      %v839 = vand.u32 %v838, 4294901760
      %840 = vmatmul.f32.gmra.mxu0 %v839
      %v841 = vpop.f32.mrf.mxu0
      %v842 = vadd.f32 %v797, %v841
      %843 = vdwg.mxu0
      %v844 = vand.u32 %v194, 4294901760
      %v845 = vsub.f32 %v194, %v844
      %v846 = vand.u32 %v845, 4294901760
      %847 = vmatpush.msra.mxu0 %v846
      %v848 = vand.u32 %v193, 4294901760
      %v849 = vsub.f32 %v193, %v848
      %v850 = vand.u32 %v849, 4294901760
      %851 = vmatpush.msra.mxu0 %v850
      %v852 = vand.u32 %v192, 4294901760
      %v853 = vsub.f32 %v192, %v852
      %v854 = vand.u32 %v853, 4294901760
      %855 = vmatpush.msra.mxu0 %v854
      %v856 = vand.u32 %v191, 4294901760
      %v857 = vsub.f32 %v191, %v856
      %v858 = vand.u32 %v857, 4294901760
      %859 = vmatpush.msra.mxu0 %v858
      %v860 = vand.u32 %v190, 4294901760
      %v861 = vsub.f32 %v190, %v860
      %v862 = vand.u32 %v861, 4294901760
      %863 = vmatpush.msra.mxu0 %v862
      %v864 = vand.u32 %v189, 4294901760
      %v865 = vsub.f32 %v189, %v864
      %v866 = vand.u32 %v865, 4294901760
      %867 = vmatpush.msra.mxu0 %v866
      %v868 = vand.u32 %v188, 4294901760
      %v869 = vsub.f32 %v188, %v868
      %v870 = vand.u32 %v869, 4294901760
      %871 = vmatpush.msra.mxu0 %v870
      %v872 = vand.u32 %v187, 4294901760
      %v873 = vsub.f32 %v187, %v872
      %v874 = vand.u32 %v873, 4294901760
      %875 = vmatpush.msra.mxu0 %v874
      %v876 = vand.u32 %v186, 4294901760
      %v877 = vsub.f32 %v186, %v876
      %v878 = vand.u32 %v877, 4294901760
      %879 = vmatpush.msra.mxu0 %v878
      %v880 = vand.u32 %v185, 4294901760
      %v881 = vsub.f32 %v185, %v880
      %v882 = vand.u32 %v881, 4294901760
      %883 = vmatpush.msra.mxu0 %v882
      %v884 = vand.u32 %v184, 4294901760
      %v885 = vsub.f32 %v184, %v884
      %v886 = vand.u32 %v885, 4294901760
      %887 = vmatpush.msra.mxu0 %v886
      %v888 = vand.u32 %v183, 4294901760
      %v889 = vsub.f32 %v183, %v888
      %v890 = vand.u32 %v889, 4294901760
      %891 = vmatpush.msra.mxu0 %v890
      %v892 = vand.u32 %v182, 4294901760
      %v893 = vsub.f32 %v182, %v892
      %v894 = vand.u32 %v893, 4294901760
      %895 = vmatpush.msra.mxu0 %v894
      %v896 = vand.u32 %v181, 4294901760
      %v897 = vsub.f32 %v181, %v896
      %v898 = vand.u32 %v897, 4294901760
      %899 = vmatpush.msra.mxu0 %v898
      %v900 = vand.u32 %v180, 4294901760
      %v901 = vsub.f32 %v180, %v900
      %v902 = vand.u32 %v901, 4294901760
      %903 = vmatpush.msra.mxu0 %v902
      %v904 = vand.u32 %v179, 4294901760
      %v905 = vsub.f32 %v179, %v904
      %v906 = vand.u32 %v905, 4294901760
      %907 = vmatpush.msra.mxu0 %v906
      %v908 = vand.u32 %v177, 4294901760
      %909 = vmatmul.f32.gmra.mxu0 %v908
      %v910 = vpop.f32.mrf.mxu0
      %v911 = vadd.f32 %v836, %v910
      %v912 = vand.u32 %v178, 4294901760
      %913 = vmatmul.f32.gmra.mxu0 %v912
      %v914 = vpop.f32.mrf.mxu0
      %v915 = vadd.f32 %v842, %v914
      %916 = vdwg.mxu0
      %v917 = vand.u32 %v194, 4294901760
      %918 = vmatpush.msra.mxu0 %v917
      %v919 = vand.u32 %v193, 4294901760
      %920 = vmatpush.msra.mxu0 %v919
      %v921 = vand.u32 %v192, 4294901760
      %922 = vmatpush.msra.mxu0 %v921
      %v923 = vand.u32 %v191, 4294901760
      %924 = vmatpush.msra.mxu0 %v923
      %v925 = vand.u32 %v190, 4294901760
      %926 = vmatpush.msra.mxu0 %v925
      %v927 = vand.u32 %v189, 4294901760
      %928 = vmatpush.msra.mxu0 %v927
      %v929 = vand.u32 %v188, 4294901760
      %930 = vmatpush.msra.mxu0 %v929
      %v931 = vand.u32 %v187, 4294901760
      %932 = vmatpush.msra.mxu0 %v931
      %v933 = vand.u32 %v186, 4294901760
      %934 = vmatpush.msra.mxu0 %v933
      %v935 = vand.u32 %v185, 4294901760
      %936 = vmatpush.msra.mxu0 %v935
      %v937 = vand.u32 %v184, 4294901760
      %938 = vmatpush.msra.mxu0 %v937
      %v939 = vand.u32 %v183, 4294901760
      %940 = vmatpush.msra.mxu0 %v939
      %v941 = vand.u32 %v182, 4294901760
      %942 = vmatpush.msra.mxu0 %v941
      %v943 = vand.u32 %v181, 4294901760
      %944 = vmatpush.msra.mxu0 %v943
      %v945 = vand.u32 %v180, 4294901760
      %946 = vmatpush.msra.mxu0 %v945
      %v947 = vand.u32 %v179, 4294901760
      %948 = vmatpush.msra.mxu0 %v947
      %v949 = vand.u32 %v177, 4294901760
      %950 = vmatmul.f32.gmra.mxu0 %v949
      %v951 = vpop.f32.mrf.mxu0
      %v952 = vadd.f32 %v911, %v951
      %v953 = vand.u32 %v178, 4294901760
      %954 = vmatmul.f32.gmra.mxu0 %v953
      %v955 = vpop.f32.mrf.mxu0
      %v956 = vadd.f32 %v915, %v955
      %957 = vdwg.mxu0
      %v958 = vld [vmem:[#allocation2 + $0x9] sm:$0xff]
      %v959 = vld [vmem:[#allocation2 + $0x11] sm:$0xff]
      %s960 = scalar_lea.vmem %s1, 256
      %v961 = vld [vmem:[%s960] sm:$0xff]
      %v962 = vld [vmem:[%s960 + $0x8] sm:$0xff]
      %v963 = vld [vmem:[%s960 + $0x10] sm:$0xff]
      %v964 = vld [vmem:[%s960 + $0x18] sm:$0xff]
      %v965 = vld [vmem:[%s960 + $0x20] sm:$0xff]
      %v966 = vld [vmem:[%s960 + $0x28] sm:$0xff]
      %v967 = vld [vmem:[%s960 + $0x30] sm:$0xff]
      %v968 = vld [vmem:[%s960 + $0x38] sm:$0xff]
      %v969 = vld [vmem:[%s960 + $0x40] sm:$0xff]
      %v970 = vld [vmem:[%s960 + $0x48] sm:$0xff]
      %v971 = vld [vmem:[%s960 + $0x50] sm:$0xff]
      %v972 = vld [vmem:[%s960 + $0x58] sm:$0xff]
      %v973 = vld [vmem:[%s960 + $0x60] sm:$0xff]
      %v974 = vld [vmem:[%s960 + $0x68] sm:$0xff]
      %v975 = vld [vmem:[%s960 + $0x70] sm:$0xff]
      %v976 = vld [vmem:[%s960 + $0x78] sm:$0xff]
      %v977 = vand.u32 %v976, 4294901760
      %978 = vmatpush.msra.mxu0 %v977
      %v979 = vand.u32 %v975, 4294901760
      %980 = vmatpush.msra.mxu0 %v979
      %v981 = vand.u32 %v974, 4294901760
      %982 = vmatpush.msra.mxu0 %v981
      %v983 = vand.u32 %v973, 4294901760
      %984 = vmatpush.msra.mxu0 %v983
      %v985 = vand.u32 %v972, 4294901760
      %986 = vmatpush.msra.mxu0 %v985
      %v987 = vand.u32 %v971, 4294901760
      %988 = vmatpush.msra.mxu0 %v987
      %v989 = vand.u32 %v970, 4294901760
      %990 = vmatpush.msra.mxu0 %v989
      %v991 = vand.u32 %v969, 4294901760
      %992 = vmatpush.msra.mxu0 %v991
      %v993 = vand.u32 %v968, 4294901760
      %994 = vmatpush.msra.mxu0 %v993
      %v995 = vand.u32 %v967, 4294901760
      %996 = vmatpush.msra.mxu0 %v995
      %v997 = vand.u32 %v966, 4294901760
      %998 = vmatpush.msra.mxu0 %v997
      %v999 = vand.u32 %v965, 4294901760
      %1000 = vmatpush.msra.mxu0 %v999
      %v1001 = vand.u32 %v964, 4294901760
      %1002 = vmatpush.msra.mxu0 %v1001
      %v1003 = vand.u32 %v963, 4294901760
      %1004 = vmatpush.msra.mxu0 %v1003
      %v1005 = vand.u32 %v962, 4294901760
      %1006 = vmatpush.msra.mxu0 %v1005
      %v1007 = vand.u32 %v961, 4294901760
      %1008 = vmatpush.msra.mxu0 %v1007
      %v1009 = vand.u32 %v958, 4294901760
      %v1010 = vsub.f32 %v958, %v1009
      %v1011 = vand.u32 %v1010, 4294901760
      %v1012 = vsub.f32 %v1010, %v1011
      %v1013 = vand.u32 %v1012, 4294901760
      %1014 = vmatmul.f32.gmra.mxu0 %v1013
      %v1015 = vpop.f32.mrf.mxu0
      %v1016 = vadd.f32 0.0, %v1015
      %v1017 = vand.u32 %v959, 4294901760
      %v1018 = vsub.f32 %v959, %v1017
      %v1019 = vand.u32 %v1018, 4294901760
      %v1020 = vsub.f32 %v1018, %v1019
      %v1021 = vand.u32 %v1020, 4294901760
      %1022 = vmatmul.f32.gmra.mxu0 %v1021
      %v1023 = vpop.f32.mrf.mxu0
      %v1024 = vadd.f32 0.0, %v1023
      %1025 = vdwg.mxu0
      %v1026 = vand.u32 %v976, 4294901760
      %v1027 = vsub.f32 %v976, %v1026
      %v1028 = vand.u32 %v1027, 4294901760
      %v1029 = vsub.f32 %v1027, %v1028
      %v1030 = vand.u32 %v1029, 4294901760
      %1031 = vmatpush.msra.mxu0 %v1030
      %v1032 = vand.u32 %v975, 4294901760
      %v1033 = vsub.f32 %v975, %v1032
      %v1034 = vand.u32 %v1033, 4294901760
      %v1035 = vsub.f32 %v1033, %v1034
      %v1036 = vand.u32 %v1035, 4294901760
      %1037 = vmatpush.msra.mxu0 %v1036
      %v1038 = vand.u32 %v974, 4294901760
      %v1039 = vsub.f32 %v974, %v1038
      %v1040 = vand.u32 %v1039, 4294901760
      %v1041 = vsub.f32 %v1039, %v1040
      %v1042 = vand.u32 %v1041, 4294901760
      %1043 = vmatpush.msra.mxu0 %v1042
      %v1044 = vand.u32 %v973, 4294901760
      %v1045 = vsub.f32 %v973, %v1044
      %v1046 = vand.u32 %v1045, 4294901760
      %v1047 = vsub.f32 %v1045, %v1046
      %v1048 = vand.u32 %v1047, 4294901760
      %1049 = vmatpush.msra.mxu0 %v1048
      %v1050 = vand.u32 %v972, 4294901760
      %v1051 = vsub.f32 %v972, %v1050
      %v1052 = vand.u32 %v1051, 4294901760
      %v1053 = vsub.f32 %v1051, %v1052
      %v1054 = vand.u32 %v1053, 4294901760
      %1055 = vmatpush.msra.mxu0 %v1054
      %v1056 = vand.u32 %v971, 4294901760
      %v1057 = vsub.f32 %v971, %v1056
      %v1058 = vand.u32 %v1057, 4294901760
      %v1059 = vsub.f32 %v1057, %v1058
      %v1060 = vand.u32 %v1059, 4294901760
      %1061 = vmatpush.msra.mxu0 %v1060
      %v1062 = vand.u32 %v970, 4294901760
      %v1063 = vsub.f32 %v970, %v1062
      %v1064 = vand.u32 %v1063, 4294901760
      %v1065 = vsub.f32 %v1063, %v1064
      %v1066 = vand.u32 %v1065, 4294901760
      %1067 = vmatpush.msra.mxu0 %v1066
      %v1068 = vand.u32 %v969, 4294901760
      %v1069 = vsub.f32 %v969, %v1068
      %v1070 = vand.u32 %v1069, 4294901760
      %v1071 = vsub.f32 %v1069, %v1070
      %v1072 = vand.u32 %v1071, 4294901760
      %1073 = vmatpush.msra.mxu0 %v1072
      %v1074 = vand.u32 %v968, 4294901760
      %v1075 = vsub.f32 %v968, %v1074
      %v1076 = vand.u32 %v1075, 4294901760
      %v1077 = vsub.f32 %v1075, %v1076
      %v1078 = vand.u32 %v1077, 4294901760
      %1079 = vmatpush.msra.mxu0 %v1078
      %v1080 = vand.u32 %v967, 4294901760
      %v1081 = vsub.f32 %v967, %v1080
      %v1082 = vand.u32 %v1081, 4294901760
      %v1083 = vsub.f32 %v1081, %v1082
      %v1084 = vand.u32 %v1083, 4294901760
      %1085 = vmatpush.msra.mxu0 %v1084
      %v1086 = vand.u32 %v966, 4294901760
      %v1087 = vsub.f32 %v966, %v1086
      %v1088 = vand.u32 %v1087, 4294901760
      %v1089 = vsub.f32 %v1087, %v1088
      %v1090 = vand.u32 %v1089, 4294901760
      %1091 = vmatpush.msra.mxu0 %v1090
      %v1092 = vand.u32 %v965, 4294901760
      %v1093 = vsub.f32 %v965, %v1092
      %v1094 = vand.u32 %v1093, 4294901760
      %v1095 = vsub.f32 %v1093, %v1094
      %v1096 = vand.u32 %v1095, 4294901760
      %1097 = vmatpush.msra.mxu0 %v1096
      %v1098 = vand.u32 %v964, 4294901760
      %v1099 = vsub.f32 %v964, %v1098
      %v1100 = vand.u32 %v1099, 4294901760
      %v1101 = vsub.f32 %v1099, %v1100
      %v1102 = vand.u32 %v1101, 4294901760
      %1103 = vmatpush.msra.mxu0 %v1102
      %v1104 = vand.u32 %v963, 4294901760
      %v1105 = vsub.f32 %v963, %v1104
      %v1106 = vand.u32 %v1105, 4294901760
      %v1107 = vsub.f32 %v1105, %v1106
      %v1108 = vand.u32 %v1107, 4294901760
      %1109 = vmatpush.msra.mxu0 %v1108
      %v1110 = vand.u32 %v962, 4294901760
      %v1111 = vsub.f32 %v962, %v1110
      %v1112 = vand.u32 %v1111, 4294901760
      %v1113 = vsub.f32 %v1111, %v1112
      %v1114 = vand.u32 %v1113, 4294901760
      %1115 = vmatpush.msra.mxu0 %v1114
      %v1116 = vand.u32 %v961, 4294901760
      %v1117 = vsub.f32 %v961, %v1116
      %v1118 = vand.u32 %v1117, 4294901760
      %v1119 = vsub.f32 %v1117, %v1118
      %v1120 = vand.u32 %v1119, 4294901760
      %1121 = vmatpush.msra.mxu0 %v1120
      %v1122 = vand.u32 %v958, 4294901760
      %1123 = vmatmul.f32.gmra.mxu0 %v1122
      %v1124 = vpop.f32.mrf.mxu0
      %v1125 = vadd.f32 %v1016, %v1124
      %v1126 = vand.u32 %v959, 4294901760
      %1127 = vmatmul.f32.gmra.mxu0 %v1126
      %v1128 = vpop.f32.mrf.mxu0
      %v1129 = vadd.f32 %v1024, %v1128
      %1130 = vdwg.mxu0
      %v1131 = vand.u32 %v976, 4294901760
      %v1132 = vsub.f32 %v976, %v1131
      %1133 = vmatpush.msra.mxu0 %v1132
      %v1134 = vand.u32 %v975, 4294901760
      %v1135 = vsub.f32 %v975, %v1134
      %1136 = vmatpush.msra.mxu0 %v1135
      %v1137 = vand.u32 %v974, 4294901760
      %v1138 = vsub.f32 %v974, %v1137
      %1139 = vmatpush.msra.mxu0 %v1138
      %v1140 = vand.u32 %v973, 4294901760
      %v1141 = vsub.f32 %v973, %v1140
      %1142 = vmatpush.msra.mxu0 %v1141
      %v1143 = vand.u32 %v972, 4294901760
      %v1144 = vsub.f32 %v972, %v1143
      %1145 = vmatpush.msra.mxu0 %v1144
      %v1146 = vand.u32 %v971, 4294901760
      %v1147 = vsub.f32 %v971, %v1146
      %1148 = vmatpush.msra.mxu0 %v1147
      %v1149 = vand.u32 %v970, 4294901760
      %v1150 = vsub.f32 %v970, %v1149
      %1151 = vmatpush.msra.mxu0 %v1150
      %v1152 = vand.u32 %v969, 4294901760
      %v1153 = vsub.f32 %v969, %v1152
      %1154 = vmatpush.msra.mxu0 %v1153
      %v1155 = vand.u32 %v968, 4294901760
      %v1156 = vsub.f32 %v968, %v1155
      %1157 = vmatpush.msra.mxu0 %v1156
      %v1158 = vand.u32 %v967, 4294901760
      %v1159 = vsub.f32 %v967, %v1158
      %1160 = vmatpush.msra.mxu0 %v1159
      %v1161 = vand.u32 %v966, 4294901760
      %v1162 = vsub.f32 %v966, %v1161
      %1163 = vmatpush.msra.mxu0 %v1162
      %v1164 = vand.u32 %v965, 4294901760
      %v1165 = vsub.f32 %v965, %v1164
      %1166 = vmatpush.msra.mxu0 %v1165
      %v1167 = vand.u32 %v964, 4294901760
      %v1168 = vsub.f32 %v964, %v1167
      %1169 = vmatpush.msra.mxu0 %v1168
      %v1170 = vand.u32 %v963, 4294901760
      %v1171 = vsub.f32 %v963, %v1170
      %1172 = vmatpush.msra.mxu0 %v1171
      %v1173 = vand.u32 %v962, 4294901760
      %v1174 = vsub.f32 %v962, %v1173
      %1175 = vmatpush.msra.mxu0 %v1174
      %v1176 = vand.u32 %v961, 4294901760
      %v1177 = vsub.f32 %v961, %v1176
      %1178 = vmatpush.msra.mxu0 %v1177
      %v1179 = vand.u32 %v958, 4294901760
      %v1180 = vsub.f32 %v958, %v1179
      %1181 = vmatmul.f32.gmra.mxu0 %v1180
      %v1182 = vpop.f32.mrf.mxu0
      %v1183 = vadd.f32 %v1125, %v1182
      %v1184 = vand.u32 %v959, 4294901760
      %v1185 = vsub.f32 %v959, %v1184
      %1186 = vmatmul.f32.gmra.mxu0 %v1185
      %v1187 = vpop.f32.mrf.mxu0
      %v1188 = vadd.f32 %v1129, %v1187
      %1189 = vdwg.mxu0
      %v1190 = vand.u32 %v976, 4294901760
      %1191 = vmatpush.msra.mxu0 %v1190
      %v1192 = vand.u32 %v975, 4294901760
      %1193 = vmatpush.msra.mxu0 %v1192
      %v1194 = vand.u32 %v974, 4294901760
      %1195 = vmatpush.msra.mxu0 %v1194
      %v1196 = vand.u32 %v973, 4294901760
      %1197 = vmatpush.msra.mxu0 %v1196
      %v1198 = vand.u32 %v972, 4294901760
      %1199 = vmatpush.msra.mxu0 %v1198
      %v1200 = vand.u32 %v971, 4294901760
      %1201 = vmatpush.msra.mxu0 %v1200
      %v1202 = vand.u32 %v970, 4294901760
      %1203 = vmatpush.msra.mxu0 %v1202
      %v1204 = vand.u32 %v969, 4294901760
      %1205 = vmatpush.msra.mxu0 %v1204
      %v1206 = vand.u32 %v968, 4294901760
      %1207 = vmatpush.msra.mxu0 %v1206
      %v1208 = vand.u32 %v967, 4294901760
      %1209 = vmatpush.msra.mxu0 %v1208
      %v1210 = vand.u32 %v966, 4294901760
      %1211 = vmatpush.msra.mxu0 %v1210
      %v1212 = vand.u32 %v965, 4294901760
      %1213 = vmatpush.msra.mxu0 %v1212
      %v1214 = vand.u32 %v964, 4294901760
      %1215 = vmatpush.msra.mxu0 %v1214
      %v1216 = vand.u32 %v963, 4294901760
      %1217 = vmatpush.msra.mxu0 %v1216
      %v1218 = vand.u32 %v962, 4294901760
      %1219 = vmatpush.msra.mxu0 %v1218
      %v1220 = vand.u32 %v961, 4294901760
      %1221 = vmatpush.msra.mxu0 %v1220
      %v1222 = vand.u32 %v958, 4294901760
      %v1223 = vsub.f32 %v958, %v1222
      %v1224 = vand.u32 %v1223, 4294901760
      %1225 = vmatmul.f32.gmra.mxu0 %v1224
      %v1226 = vpop.f32.mrf.mxu0
      %v1227 = vadd.f32 %v1183, %v1226
      %v1228 = vand.u32 %v959, 4294901760
      %v1229 = vsub.f32 %v959, %v1228
      %v1230 = vand.u32 %v1229, 4294901760
      %1231 = vmatmul.f32.gmra.mxu0 %v1230
      %v1232 = vpop.f32.mrf.mxu0
      %v1233 = vadd.f32 %v1188, %v1232
      %1234 = vdwg.mxu0
      %v1235 = vand.u32 %v976, 4294901760
      %v1236 = vsub.f32 %v976, %v1235
      %v1237 = vand.u32 %v1236, 4294901760
      %1238 = vmatpush.msra.mxu0 %v1237
      %v1239 = vand.u32 %v975, 4294901760
      %v1240 = vsub.f32 %v975, %v1239
      %v1241 = vand.u32 %v1240, 4294901760
      %1242 = vmatpush.msra.mxu0 %v1241
      %v1243 = vand.u32 %v974, 4294901760
      %v1244 = vsub.f32 %v974, %v1243
      %v1245 = vand.u32 %v1244, 4294901760
      %1246 = vmatpush.msra.mxu0 %v1245
      %v1247 = vand.u32 %v973, 4294901760
      %v1248 = vsub.f32 %v973, %v1247
      %v1249 = vand.u32 %v1248, 4294901760
      %1250 = vmatpush.msra.mxu0 %v1249
      %v1251 = vand.u32 %v972, 4294901760
      %v1252 = vsub.f32 %v972, %v1251
      %v1253 = vand.u32 %v1252, 4294901760
      %1254 = vmatpush.msra.mxu0 %v1253
      %v1255 = vand.u32 %v971, 4294901760
      %v1256 = vsub.f32 %v971, %v1255
      %v1257 = vand.u32 %v1256, 4294901760
      %1258 = vmatpush.msra.mxu0 %v1257
      %v1259 = vand.u32 %v970, 4294901760
      %v1260 = vsub.f32 %v970, %v1259
      %v1261 = vand.u32 %v1260, 4294901760
      %1262 = vmatpush.msra.mxu0 %v1261
      %v1263 = vand.u32 %v969, 4294901760
      %v1264 = vsub.f32 %v969, %v1263
      %v1265 = vand.u32 %v1264, 4294901760
      %1266 = vmatpush.msra.mxu0 %v1265
      %v1267 = vand.u32 %v968, 4294901760
      %v1268 = vsub.f32 %v968, %v1267
      %v1269 = vand.u32 %v1268, 4294901760
      %1270 = vmatpush.msra.mxu0 %v1269
      %v1271 = vand.u32 %v967, 4294901760
      %v1272 = vsub.f32 %v967, %v1271
      %v1273 = vand.u32 %v1272, 4294901760
      %1274 = vmatpush.msra.mxu0 %v1273
      %v1275 = vand.u32 %v966, 4294901760
      %v1276 = vsub.f32 %v966, %v1275
      %v1277 = vand.u32 %v1276, 4294901760
      %1278 = vmatpush.msra.mxu0 %v1277
      %v1279 = vand.u32 %v965, 4294901760
      %v1280 = vsub.f32 %v965, %v1279
      %v1281 = vand.u32 %v1280, 4294901760
      %1282 = vmatpush.msra.mxu0 %v1281
      %v1283 = vand.u32 %v964, 4294901760
      %v1284 = vsub.f32 %v964, %v1283
      %v1285 = vand.u32 %v1284, 4294901760
      %1286 = vmatpush.msra.mxu0 %v1285
      %v1287 = vand.u32 %v963, 4294901760
      %v1288 = vsub.f32 %v963, %v1287
      %v1289 = vand.u32 %v1288, 4294901760
      %1290 = vmatpush.msra.mxu0 %v1289
      %v1291 = vand.u32 %v962, 4294901760
      %v1292 = vsub.f32 %v962, %v1291
      %v1293 = vand.u32 %v1292, 4294901760
      %1294 = vmatpush.msra.mxu0 %v1293
      %v1295 = vand.u32 %v961, 4294901760
      %v1296 = vsub.f32 %v961, %v1295
      %v1297 = vand.u32 %v1296, 4294901760
      %1298 = vmatpush.msra.mxu0 %v1297
      %v1299 = vand.u32 %v958, 4294901760
      %1300 = vmatmul.f32.gmra.mxu0 %v1299
      %v1301 = vpop.f32.mrf.mxu0
      %v1302 = vadd.f32 %v1227, %v1301
      %v1303 = vand.u32 %v959, 4294901760
      %1304 = vmatmul.f32.gmra.mxu0 %v1303
      %v1305 = vpop.f32.mrf.mxu0
      %v1306 = vadd.f32 %v1233, %v1305
      %1307 = vdwg.mxu0
      %v1308 = vand.u32 %v976, 4294901760
      %1309 = vmatpush.msra.mxu0 %v1308
      %v1310 = vand.u32 %v975, 4294901760
      %1311 = vmatpush.msra.mxu0 %v1310
      %v1312 = vand.u32 %v974, 4294901760
      %1313 = vmatpush.msra.mxu0 %v1312
      %v1314 = vand.u32 %v973, 4294901760
      %1315 = vmatpush.msra.mxu0 %v1314
      %v1316 = vand.u32 %v972, 4294901760
      %1317 = vmatpush.msra.mxu0 %v1316
      %v1318 = vand.u32 %v971, 4294901760
      %1319 = vmatpush.msra.mxu0 %v1318
      %v1320 = vand.u32 %v970, 4294901760
      %1321 = vmatpush.msra.mxu0 %v1320
      %v1322 = vand.u32 %v969, 4294901760
      %1323 = vmatpush.msra.mxu0 %v1322
      %v1324 = vand.u32 %v968, 4294901760
      %1325 = vmatpush.msra.mxu0 %v1324
      %v1326 = vand.u32 %v967, 4294901760
      %1327 = vmatpush.msra.mxu0 %v1326
      %v1328 = vand.u32 %v966, 4294901760
      %1329 = vmatpush.msra.mxu0 %v1328
      %v1330 = vand.u32 %v965, 4294901760
      %1331 = vmatpush.msra.mxu0 %v1330
      %v1332 = vand.u32 %v964, 4294901760
      %1333 = vmatpush.msra.mxu0 %v1332
      %v1334 = vand.u32 %v963, 4294901760
      %1335 = vmatpush.msra.mxu0 %v1334
      %v1336 = vand.u32 %v962, 4294901760
      %1337 = vmatpush.msra.mxu0 %v1336
      %v1338 = vand.u32 %v961, 4294901760
      %1339 = vmatpush.msra.mxu0 %v1338
      %v1340 = vand.u32 %v958, 4294901760
      %1341 = vmatmul.f32.gmra.mxu0 %v1340
      %v1342 = vpop.f32.mrf.mxu0
      %v1343 = vadd.f32 %v1302, %v1342
      %v1344 = vand.u32 %v959, 4294901760
      %1345 = vmatmul.f32.gmra.mxu0 %v1344
      %v1346 = vpop.f32.mrf.mxu0
      %v1347 = vadd.f32 %v1306, %v1346
      %1348 = vdwg.mxu0
      %v1349 = vadd.f32 %v952, %v1343
      %v1350 = vadd.f32 %v956, %v1347
      %v1351 = vld [vmem:[%s2] sm:$0x1]
      %v1353 = vperm.slane %v1351, 0
      %v1355 = vadd.f32 %v1349, %v1353
      %v1356 = vadd.f32 %v1350, %v1353
      %vm1357 = vcmp.ge.f32.partialorder %v1355, 0.0
      %vm1358 = vcmp.ge.f32.partialorder %v1356, 0.0
      %v1359 = vmul.f32 %v1355, 0.01
      %v1360 = vmul.f32 %v1356, 0.01
      %v1361 = vsel %vm1357, %v1355, %v1359
      %v1362 = vsel %vm1358, %v1356, %v1360
      %1363 = vst [vmem:[#allocation2 + $0x8] sm:$0xff] %v1361
      %1364 = vst [vmem:[#allocation2 + $0x10] sm:$0xff] %v1362
      %v1365 = vld [vmem:[#allocation2 + $0x7] sm:$0xff]
      %v1366 = vld [vmem:[#allocation2 + $0xf] sm:$0xff]
      %s1367 = scalar_lea.vmem %s1, 384
      %v1368 = vld [vmem:[%s1367] sm:$0xff]
      %v1369 = vld [vmem:[%s1367 + $0x8] sm:$0xff]
      %v1370 = vld [vmem:[%s1367 + $0x10] sm:$0xff]
      %v1371 = vld [vmem:[%s1367 + $0x18] sm:$0xff]
      %v1372 = vld [vmem:[%s1367 + $0x20] sm:$0xff]
      %v1373 = vld [vmem:[%s1367 + $0x28] sm:$0xff]
      %v1374 = vld [vmem:[%s1367 + $0x30] sm:$0xff]
      %v1375 = vld [vmem:[%s1367 + $0x38] sm:$0xff]
      %v1376 = vld [vmem:[%s1367 + $0x40] sm:$0xff]
      %v1377 = vld [vmem:[%s1367 + $0x48] sm:$0xff]
      %v1378 = vld [vmem:[%s1367 + $0x50] sm:$0xff]
      %v1379 = vld [vmem:[%s1367 + $0x58] sm:$0xff]
      %v1380 = vld [vmem:[%s1367 + $0x60] sm:$0xff]
      %v1381 = vld [vmem:[%s1367 + $0x68] sm:$0xff]
      %v1382 = vld [vmem:[%s1367 + $0x70] sm:$0xff]
      %v1383 = vld [vmem:[%s1367 + $0x78] sm:$0xff]
      %v1384 = vld [vmem:[#allocation2 + $0x8] sm:$0xff]
      %v1385 = vld [vmem:[#allocation2 + $0x10] sm:$0xff]
      %s1386 = scalar_lea.vmem %s1, 512
      %v1387 = vld [vmem:[%s1386] sm:$0xff]
      %v1388 = vld [vmem:[%s1386 + $0x8] sm:$0xff]
      %v1389 = vld [vmem:[%s1386 + $0x10] sm:$0xff]
      %v1390 = vld [vmem:[%s1386 + $0x18] sm:$0xff]
      %v1391 = vld [vmem:[%s1386 + $0x20] sm:$0xff]
      %v1392 = vld [vmem:[%s1386 + $0x28] sm:$0xff]
      %v1393 = vld [vmem:[%s1386 + $0x30] sm:$0xff]
      %v1394 = vld [vmem:[%s1386 + $0x38] sm:$0xff]
      %v1395 = vld [vmem:[%s1386 + $0x40] sm:$0xff]
      %v1396 = vld [vmem:[%s1386 + $0x48] sm:$0xff]
      %v1397 = vld [vmem:[%s1386 + $0x50] sm:$0xff]
      %v1398 = vld [vmem:[%s1386 + $0x58] sm:$0xff]
      %v1399 = vld [vmem:[%s1386 + $0x60] sm:$0xff]
      %v1400 = vld [vmem:[%s1386 + $0x68] sm:$0xff]
      %v1401 = vld [vmem:[%s1386 + $0x70] sm:$0xff]
      %v1402 = vld [vmem:[%s1386 + $0x78] sm:$0xff]
      %v1403 = vand.u32 %v1402, 4294901760
      %1404 = vmatpush.msra.mxu0 %v1403
      %v1405 = vand.u32 %v1401, 4294901760
      %1406 = vmatpush.msra.mxu0 %v1405
      %v1407 = vand.u32 %v1400, 4294901760
      %1408 = vmatpush.msra.mxu0 %v1407
      %v1409 = vand.u32 %v1399, 4294901760
      %1410 = vmatpush.msra.mxu0 %v1409
      %v1411 = vand.u32 %v1398, 4294901760
      %1412 = vmatpush.msra.mxu0 %v1411
      %v1413 = vand.u32 %v1397, 4294901760
      %1414 = vmatpush.msra.mxu0 %v1413
      %v1415 = vand.u32 %v1396, 4294901760
      %1416 = vmatpush.msra.mxu0 %v1415
      %v1417 = vand.u32 %v1395, 4294901760
      %1418 = vmatpush.msra.mxu0 %v1417
      %v1419 = vand.u32 %v1394, 4294901760
      %1420 = vmatpush.msra.mxu0 %v1419
      %v1421 = vand.u32 %v1393, 4294901760
      %1422 = vmatpush.msra.mxu0 %v1421
      %v1423 = vand.u32 %v1392, 4294901760
      %1424 = vmatpush.msra.mxu0 %v1423
      %v1425 = vand.u32 %v1391, 4294901760
      %1426 = vmatpush.msra.mxu0 %v1425
      %v1427 = vand.u32 %v1390, 4294901760
      %1428 = vmatpush.msra.mxu0 %v1427
      %v1429 = vand.u32 %v1389, 4294901760
      %1430 = vmatpush.msra.mxu0 %v1429
      %v1431 = vand.u32 %v1388, 4294901760
      %1432 = vmatpush.msra.mxu0 %v1431
      %v1433 = vand.u32 %v1387, 4294901760
      %1434 = vmatpush.msra.mxu0 %v1433
      %v1435 = vand.u32 %v1384, 4294901760
      %v1436 = vsub.f32 %v1384, %v1435
      %v1437 = vand.u32 %v1436, 4294901760
      %v1438 = vsub.f32 %v1436, %v1437
      %v1439 = vand.u32 %v1438, 4294901760
      %1440 = vmatmul.f32.gmra.mxu0 %v1439
      %v1441 = vpop.f32.mrf.mxu0
      %v1442 = vadd.f32 0.0, %v1441
      %v1443 = vand.u32 %v1385, 4294901760
      %v1444 = vsub.f32 %v1385, %v1443
      %v1445 = vand.u32 %v1444, 4294901760
      %v1446 = vsub.f32 %v1444, %v1445
      %v1447 = vand.u32 %v1446, 4294901760
      %1448 = vmatmul.f32.gmra.mxu0 %v1447
      %v1449 = vpop.f32.mrf.mxu0
      %v1450 = vadd.f32 0.0, %v1449
      %1451 = vdwg.mxu0
      %v1452 = vand.u32 %v1402, 4294901760
      %v1453 = vsub.f32 %v1402, %v1452
      %v1454 = vand.u32 %v1453, 4294901760
      %v1455 = vsub.f32 %v1453, %v1454
      %v1456 = vand.u32 %v1455, 4294901760
      %1457 = vmatpush.msra.mxu0 %v1456
      %v1458 = vand.u32 %v1401, 4294901760
      %v1459 = vsub.f32 %v1401, %v1458
      %v1460 = vand.u32 %v1459, 4294901760
      %v1461 = vsub.f32 %v1459, %v1460
      %v1462 = vand.u32 %v1461, 4294901760
      %1463 = vmatpush.msra.mxu0 %v1462
      %v1464 = vand.u32 %v1400, 4294901760
      %v1465 = vsub.f32 %v1400, %v1464
      %v1466 = vand.u32 %v1465, 4294901760
      %v1467 = vsub.f32 %v1465, %v1466
      %v1468 = vand.u32 %v1467, 4294901760
      %1469 = vmatpush.msra.mxu0 %v1468
      %v1470 = vand.u32 %v1399, 4294901760
      %v1471 = vsub.f32 %v1399, %v1470
      %v1472 = vand.u32 %v1471, 4294901760
      %v1473 = vsub.f32 %v1471, %v1472
      %v1474 = vand.u32 %v1473, 4294901760
      %1475 = vmatpush.msra.mxu0 %v1474
      %v1476 = vand.u32 %v1398, 4294901760
      %v1477 = vsub.f32 %v1398, %v1476
      %v1478 = vand.u32 %v1477, 4294901760
      %v1479 = vsub.f32 %v1477, %v1478
      %v1480 = vand.u32 %v1479, 4294901760
      %1481 = vmatpush.msra.mxu0 %v1480
      %v1482 = vand.u32 %v1397, 4294901760
      %v1483 = vsub.f32 %v1397, %v1482
      %v1484 = vand.u32 %v1483, 4294901760
      %v1485 = vsub.f32 %v1483, %v1484
      %v1486 = vand.u32 %v1485, 4294901760
      %1487 = vmatpush.msra.mxu0 %v1486
      %v1488 = vand.u32 %v1396, 4294901760
      %v1489 = vsub.f32 %v1396, %v1488
      %v1490 = vand.u32 %v1489, 4294901760
      %v1491 = vsub.f32 %v1489, %v1490
      %v1492 = vand.u32 %v1491, 4294901760
      %1493 = vmatpush.msra.mxu0 %v1492
      %v1494 = vand.u32 %v1395, 4294901760
      %v1495 = vsub.f32 %v1395, %v1494
      %v1496 = vand.u32 %v1495, 4294901760
      %v1497 = vsub.f32 %v1495, %v1496
      %v1498 = vand.u32 %v1497, 4294901760
      %1499 = vmatpush.msra.mxu0 %v1498
      %v1500 = vand.u32 %v1394, 4294901760
      %v1501 = vsub.f32 %v1394, %v1500
      %v1502 = vand.u32 %v1501, 4294901760
      %v1503 = vsub.f32 %v1501, %v1502
      %v1504 = vand.u32 %v1503, 4294901760
      %1505 = vmatpush.msra.mxu0 %v1504
      %v1506 = vand.u32 %v1393, 4294901760
      %v1507 = vsub.f32 %v1393, %v1506
      %v1508 = vand.u32 %v1507, 4294901760
      %v1509 = vsub.f32 %v1507, %v1508
      %v1510 = vand.u32 %v1509, 4294901760
      %1511 = vmatpush.msra.mxu0 %v1510
      %v1512 = vand.u32 %v1392, 4294901760
      %v1513 = vsub.f32 %v1392, %v1512
      %v1514 = vand.u32 %v1513, 4294901760
      %v1515 = vsub.f32 %v1513, %v1514
      %v1516 = vand.u32 %v1515, 4294901760
      %1517 = vmatpush.msra.mxu0 %v1516
      %v1518 = vand.u32 %v1391, 4294901760
      %v1519 = vsub.f32 %v1391, %v1518
      %v1520 = vand.u32 %v1519, 4294901760
      %v1521 = vsub.f32 %v1519, %v1520
      %v1522 = vand.u32 %v1521, 4294901760
      %1523 = vmatpush.msra.mxu0 %v1522
      %v1524 = vand.u32 %v1390, 4294901760
      %v1525 = vsub.f32 %v1390, %v1524
      %v1526 = vand.u32 %v1525, 4294901760
      %v1527 = vsub.f32 %v1525, %v1526
      %v1528 = vand.u32 %v1527, 4294901760
      %1529 = vmatpush.msra.mxu0 %v1528
      %v1530 = vand.u32 %v1389, 4294901760
      %v1531 = vsub.f32 %v1389, %v1530
      %v1532 = vand.u32 %v1531, 4294901760
      %v1533 = vsub.f32 %v1531, %v1532
      %v1534 = vand.u32 %v1533, 4294901760
      %1535 = vmatpush.msra.mxu0 %v1534
      %v1536 = vand.u32 %v1388, 4294901760
      %v1537 = vsub.f32 %v1388, %v1536
      %v1538 = vand.u32 %v1537, 4294901760
      %v1539 = vsub.f32 %v1537, %v1538
      %v1540 = vand.u32 %v1539, 4294901760
      %1541 = vmatpush.msra.mxu0 %v1540
      %v1542 = vand.u32 %v1387, 4294901760
      %v1543 = vsub.f32 %v1387, %v1542
      %v1544 = vand.u32 %v1543, 4294901760
      %v1545 = vsub.f32 %v1543, %v1544
      %v1546 = vand.u32 %v1545, 4294901760
      %1547 = vmatpush.msra.mxu0 %v1546
      %v1548 = vand.u32 %v1384, 4294901760
      %1549 = vmatmul.f32.gmra.mxu0 %v1548
      %v1550 = vpop.f32.mrf.mxu0
      %v1551 = vadd.f32 %v1442, %v1550
      %v1552 = vand.u32 %v1385, 4294901760
      %1553 = vmatmul.f32.gmra.mxu0 %v1552
      %v1554 = vpop.f32.mrf.mxu0
      %v1555 = vadd.f32 %v1450, %v1554
      %1556 = vdwg.mxu0
      %v1557 = vand.u32 %v1402, 4294901760
      %v1558 = vsub.f32 %v1402, %v1557
      %1559 = vmatpush.msra.mxu0 %v1558
      %v1560 = vand.u32 %v1401, 4294901760
      %v1561 = vsub.f32 %v1401, %v1560
      %1562 = vmatpush.msra.mxu0 %v1561
      %v1563 = vand.u32 %v1400, 4294901760
      %v1564 = vsub.f32 %v1400, %v1563
      %1565 = vmatpush.msra.mxu0 %v1564
      %v1566 = vand.u32 %v1399, 4294901760
      %v1567 = vsub.f32 %v1399, %v1566
      %1568 = vmatpush.msra.mxu0 %v1567
      %v1569 = vand.u32 %v1398, 4294901760
      %v1570 = vsub.f32 %v1398, %v1569
      %1571 = vmatpush.msra.mxu0 %v1570
      %v1572 = vand.u32 %v1397, 4294901760
      %v1573 = vsub.f32 %v1397, %v1572
      %1574 = vmatpush.msra.mxu0 %v1573
      %v1575 = vand.u32 %v1396, 4294901760
      %v1576 = vsub.f32 %v1396, %v1575
      %1577 = vmatpush.msra.mxu0 %v1576
      %v1578 = vand.u32 %v1395, 4294901760
      %v1579 = vsub.f32 %v1395, %v1578
      %1580 = vmatpush.msra.mxu0 %v1579
      %v1581 = vand.u32 %v1394, 4294901760
      %v1582 = vsub.f32 %v1394, %v1581
      %1583 = vmatpush.msra.mxu0 %v1582
      %v1584 = vand.u32 %v1393, 4294901760
      %v1585 = vsub.f32 %v1393, %v1584
      %1586 = vmatpush.msra.mxu0 %v1585
      %v1587 = vand.u32 %v1392, 4294901760
      %v1588 = vsub.f32 %v1392, %v1587
      %1589 = vmatpush.msra.mxu0 %v1588
      %v1590 = vand.u32 %v1391, 4294901760
      %v1591 = vsub.f32 %v1391, %v1590
      %1592 = vmatpush.msra.mxu0 %v1591
      %v1593 = vand.u32 %v1390, 4294901760
      %v1594 = vsub.f32 %v1390, %v1593
      %1595 = vmatpush.msra.mxu0 %v1594
      %v1596 = vand.u32 %v1389, 4294901760
      %v1597 = vsub.f32 %v1389, %v1596
      %1598 = vmatpush.msra.mxu0 %v1597
      %v1599 = vand.u32 %v1388, 4294901760
      %v1600 = vsub.f32 %v1388, %v1599
      %1601 = vmatpush.msra.mxu0 %v1600
      %v1602 = vand.u32 %v1387, 4294901760
      %v1603 = vsub.f32 %v1387, %v1602
      %1604 = vmatpush.msra.mxu0 %v1603
      %v1605 = vand.u32 %v1384, 4294901760
      %v1606 = vsub.f32 %v1384, %v1605
      %1607 = vmatmul.f32.gmra.mxu0 %v1606
      %v1608 = vpop.f32.mrf.mxu0
      %v1609 = vadd.f32 %v1551, %v1608
      %v1610 = vand.u32 %v1385, 4294901760
      %v1611 = vsub.f32 %v1385, %v1610
      %1612 = vmatmul.f32.gmra.mxu0 %v1611
      %v1613 = vpop.f32.mrf.mxu0
      %v1614 = vadd.f32 %v1555, %v1613
      %1615 = vdwg.mxu0
      %v1616 = vand.u32 %v1402, 4294901760
      %1617 = vmatpush.msra.mxu0 %v1616
      %v1618 = vand.u32 %v1401, 4294901760
      %1619 = vmatpush.msra.mxu0 %v1618
      %v1620 = vand.u32 %v1400, 4294901760
      %1621 = vmatpush.msra.mxu0 %v1620
      %v1622 = vand.u32 %v1399, 4294901760
      %1623 = vmatpush.msra.mxu0 %v1622
      %v1624 = vand.u32 %v1398, 4294901760
      %1625 = vmatpush.msra.mxu0 %v1624
      %v1626 = vand.u32 %v1397, 4294901760
      %1627 = vmatpush.msra.mxu0 %v1626
      %v1628 = vand.u32 %v1396, 4294901760
      %1629 = vmatpush.msra.mxu0 %v1628
      %v1630 = vand.u32 %v1395, 4294901760
      %1631 = vmatpush.msra.mxu0 %v1630
      %v1632 = vand.u32 %v1394, 4294901760
      %1633 = vmatpush.msra.mxu0 %v1632
      %v1634 = vand.u32 %v1393, 4294901760
      %1635 = vmatpush.msra.mxu0 %v1634
      %v1636 = vand.u32 %v1392, 4294901760
      %1637 = vmatpush.msra.mxu0 %v1636
      %v1638 = vand.u32 %v1391, 4294901760
      %1639 = vmatpush.msra.mxu0 %v1638
      %v1640 = vand.u32 %v1390, 4294901760
      %1641 = vmatpush.msra.mxu0 %v1640
      %v1642 = vand.u32 %v1389, 4294901760
      %1643 = vmatpush.msra.mxu0 %v1642
      %v1644 = vand.u32 %v1388, 4294901760
      %1645 = vmatpush.msra.mxu0 %v1644
      %v1646 = vand.u32 %v1387, 4294901760
      %1647 = vmatpush.msra.mxu0 %v1646
      %v1648 = vand.u32 %v1384, 4294901760
      %v1649 = vsub.f32 %v1384, %v1648
      %v1650 = vand.u32 %v1649, 4294901760
      %1651 = vmatmul.f32.gmra.mxu0 %v1650
      %v1652 = vpop.f32.mrf.mxu0
      %v1653 = vadd.f32 %v1609, %v1652
      %v1654 = vand.u32 %v1385, 4294901760
      %v1655 = vsub.f32 %v1385, %v1654
      %v1656 = vand.u32 %v1655, 4294901760
      %1657 = vmatmul.f32.gmra.mxu0 %v1656
      %v1658 = vpop.f32.mrf.mxu0
      %v1659 = vadd.f32 %v1614, %v1658
      %1660 = vdwg.mxu0
      %v1661 = vand.u32 %v1402, 4294901760
      %v1662 = vsub.f32 %v1402, %v1661
      %v1663 = vand.u32 %v1662, 4294901760
      %1664 = vmatpush.msra.mxu0 %v1663
      %v1665 = vand.u32 %v1401, 4294901760
      %v1666 = vsub.f32 %v1401, %v1665
      %v1667 = vand.u32 %v1666, 4294901760
      %1668 = vmatpush.msra.mxu0 %v1667
      %v1669 = vand.u32 %v1400, 4294901760
      %v1670 = vsub.f32 %v1400, %v1669
      %v1671 = vand.u32 %v1670, 4294901760
      %1672 = vmatpush.msra.mxu0 %v1671
      %v1673 = vand.u32 %v1399, 4294901760
      %v1674 = vsub.f32 %v1399, %v1673
      %v1675 = vand.u32 %v1674, 4294901760
      %1676 = vmatpush.msra.mxu0 %v1675
      %v1677 = vand.u32 %v1398, 4294901760
      %v1678 = vsub.f32 %v1398, %v1677
      %v1679 = vand.u32 %v1678, 4294901760
      %1680 = vmatpush.msra.mxu0 %v1679
      %v1681 = vand.u32 %v1397, 4294901760
      %v1682 = vsub.f32 %v1397, %v1681
      %v1683 = vand.u32 %v1682, 4294901760
      %1684 = vmatpush.msra.mxu0 %v1683
      %v1685 = vand.u32 %v1396, 4294901760
      %v1686 = vsub.f32 %v1396, %v1685
      %v1687 = vand.u32 %v1686, 4294901760
      %1688 = vmatpush.msra.mxu0 %v1687
      %v1689 = vand.u32 %v1395, 4294901760
      %v1690 = vsub.f32 %v1395, %v1689
      %v1691 = vand.u32 %v1690, 4294901760
      %1692 = vmatpush.msra.mxu0 %v1691
      %v1693 = vand.u32 %v1394, 4294901760
      %v1694 = vsub.f32 %v1394, %v1693
      %v1695 = vand.u32 %v1694, 4294901760
      %1696 = vmatpush.msra.mxu0 %v1695
      %v1697 = vand.u32 %v1393, 4294901760
      %v1698 = vsub.f32 %v1393, %v1697
      %v1699 = vand.u32 %v1698, 4294901760
      %1700 = vmatpush.msra.mxu0 %v1699
      %v1701 = vand.u32 %v1392, 4294901760
      %v1702 = vsub.f32 %v1392, %v1701
      %v1703 = vand.u32 %v1702, 4294901760
      %1704 = vmatpush.msra.mxu0 %v1703
      %v1705 = vand.u32 %v1391, 4294901760
      %v1706 = vsub.f32 %v1391, %v1705
      %v1707 = vand.u32 %v1706, 4294901760
      %1708 = vmatpush.msra.mxu0 %v1707
      %v1709 = vand.u32 %v1390, 4294901760
      %v1710 = vsub.f32 %v1390, %v1709
      %v1711 = vand.u32 %v1710, 4294901760
      %1712 = vmatpush.msra.mxu0 %v1711
      %v1713 = vand.u32 %v1389, 4294901760
      %v1714 = vsub.f32 %v1389, %v1713
      %v1715 = vand.u32 %v1714, 4294901760
      %1716 = vmatpush.msra.mxu0 %v1715
      %v1717 = vand.u32 %v1388, 4294901760
      %v1718 = vsub.f32 %v1388, %v1717
      %v1719 = vand.u32 %v1718, 4294901760
      %1720 = vmatpush.msra.mxu0 %v1719
      %v1721 = vand.u32 %v1387, 4294901760
      %v1722 = vsub.f32 %v1387, %v1721
      %v1723 = vand.u32 %v1722, 4294901760
      %1724 = vmatpush.msra.mxu0 %v1723
      %v1725 = vand.u32 %v1384, 4294901760
      %1726 = vmatmul.f32.gmra.mxu0 %v1725
      %v1727 = vpop.f32.mrf.mxu0
      %v1728 = vadd.f32 %v1653, %v1727
      %v1729 = vand.u32 %v1385, 4294901760
      %1730 = vmatmul.f32.gmra.mxu0 %v1729
      %v1731 = vpop.f32.mrf.mxu0
      %v1732 = vadd.f32 %v1659, %v1731
      %1733 = vdwg.mxu0
      %v1734 = vand.u32 %v1402, 4294901760
      %1735 = vmatpush.msra.mxu0 %v1734
      %v1736 = vand.u32 %v1401, 4294901760
      %1737 = vmatpush.msra.mxu0 %v1736
      %v1738 = vand.u32 %v1400, 4294901760
      %1739 = vmatpush.msra.mxu0 %v1738
      %v1740 = vand.u32 %v1399, 4294901760
      %1741 = vmatpush.msra.mxu0 %v1740
      %v1742 = vand.u32 %v1398, 4294901760
      %1743 = vmatpush.msra.mxu0 %v1742
      %v1744 = vand.u32 %v1397, 4294901760
      %1745 = vmatpush.msra.mxu0 %v1744
      %v1746 = vand.u32 %v1396, 4294901760
      %1747 = vmatpush.msra.mxu0 %v1746
      %v1748 = vand.u32 %v1395, 4294901760
      %1749 = vmatpush.msra.mxu0 %v1748
      %v1750 = vand.u32 %v1394, 4294901760
      %1751 = vmatpush.msra.mxu0 %v1750
      %v1752 = vand.u32 %v1393, 4294901760
      %1753 = vmatpush.msra.mxu0 %v1752
      %v1754 = vand.u32 %v1392, 4294901760
      %1755 = vmatpush.msra.mxu0 %v1754
      %v1756 = vand.u32 %v1391, 4294901760
      %1757 = vmatpush.msra.mxu0 %v1756
      %v1758 = vand.u32 %v1390, 4294901760
      %1759 = vmatpush.msra.mxu0 %v1758
      %v1760 = vand.u32 %v1389, 4294901760
      %1761 = vmatpush.msra.mxu0 %v1760
      %v1762 = vand.u32 %v1388, 4294901760
      %1763 = vmatpush.msra.mxu0 %v1762
      %v1764 = vand.u32 %v1387, 4294901760
      %1765 = vmatpush.msra.mxu0 %v1764
      %v1766 = vand.u32 %v1384, 4294901760
      %1767 = vmatmul.f32.gmra.mxu0 %v1766
      %v1768 = vpop.f32.mrf.mxu0
      %v1769 = vadd.f32 %v1728, %v1768
      %v1770 = vand.u32 %v1385, 4294901760
      %1771 = vmatmul.f32.gmra.mxu0 %v1770
      %v1772 = vpop.f32.mrf.mxu0
      %v1773 = vadd.f32 %v1732, %v1772
      %1774 = vdwg.mxu0
      %v1775 = vand.u32 %v1383, 4294901760
      %1776 = vmatpush.msra.mxu0 %v1775
      %v1777 = vand.u32 %v1382, 4294901760
      %1778 = vmatpush.msra.mxu0 %v1777
      %v1779 = vand.u32 %v1381, 4294901760
      %1780 = vmatpush.msra.mxu0 %v1779
      %v1781 = vand.u32 %v1380, 4294901760
      %1782 = vmatpush.msra.mxu0 %v1781
      %v1783 = vand.u32 %v1379, 4294901760
      %1784 = vmatpush.msra.mxu0 %v1783
      %v1785 = vand.u32 %v1378, 4294901760
      %1786 = vmatpush.msra.mxu0 %v1785
      %v1787 = vand.u32 %v1377, 4294901760
      %1788 = vmatpush.msra.mxu0 %v1787
      %v1789 = vand.u32 %v1376, 4294901760
      %1790 = vmatpush.msra.mxu0 %v1789
      %v1791 = vand.u32 %v1375, 4294901760
      %1792 = vmatpush.msra.mxu0 %v1791
      %v1793 = vand.u32 %v1374, 4294901760
      %1794 = vmatpush.msra.mxu0 %v1793
      %v1795 = vand.u32 %v1373, 4294901760
      %1796 = vmatpush.msra.mxu0 %v1795
      %v1797 = vand.u32 %v1372, 4294901760
      %1798 = vmatpush.msra.mxu0 %v1797
      %v1799 = vand.u32 %v1371, 4294901760
      %1800 = vmatpush.msra.mxu0 %v1799
      %v1801 = vand.u32 %v1370, 4294901760
      %1802 = vmatpush.msra.mxu0 %v1801
      %v1803 = vand.u32 %v1369, 4294901760
      %1804 = vmatpush.msra.mxu0 %v1803
      %v1805 = vand.u32 %v1368, 4294901760
      %1806 = vmatpush.msra.mxu0 %v1805
      %v1807 = vand.u32 %v1365, 4294901760
      %v1808 = vsub.f32 %v1365, %v1807
      %v1809 = vand.u32 %v1808, 4294901760
      %v1810 = vsub.f32 %v1808, %v1809
      %v1811 = vand.u32 %v1810, 4294901760
      %1812 = vmatmul.f32.gmra.mxu0 %v1811
      %v1813 = vpop.f32.mrf.mxu0
      %v1814 = vadd.f32 %v1769, %v1813
      %v1815 = vand.u32 %v1366, 4294901760
      %v1816 = vsub.f32 %v1366, %v1815
      %v1817 = vand.u32 %v1816, 4294901760
      %v1818 = vsub.f32 %v1816, %v1817
      %v1819 = vand.u32 %v1818, 4294901760
      %1820 = vmatmul.f32.gmra.mxu0 %v1819
      %v1821 = vpop.f32.mrf.mxu0
      %v1822 = vadd.f32 %v1773, %v1821
      %1823 = vdwg.mxu0
      %v1824 = vand.u32 %v1383, 4294901760
      %v1825 = vsub.f32 %v1383, %v1824
      %v1826 = vand.u32 %v1825, 4294901760
      %v1827 = vsub.f32 %v1825, %v1826
      %v1828 = vand.u32 %v1827, 4294901760
      %1829 = vmatpush.msra.mxu0 %v1828
      %v1830 = vand.u32 %v1382, 4294901760
      %v1831 = vsub.f32 %v1382, %v1830
      %v1832 = vand.u32 %v1831, 4294901760
      %v1833 = vsub.f32 %v1831, %v1832
      %v1834 = vand.u32 %v1833, 4294901760
      %1835 = vmatpush.msra.mxu0 %v1834
      %v1836 = vand.u32 %v1381, 4294901760
      %v1837 = vsub.f32 %v1381, %v1836
      %v1838 = vand.u32 %v1837, 4294901760
      %v1839 = vsub.f32 %v1837, %v1838
      %v1840 = vand.u32 %v1839, 4294901760
      %1841 = vmatpush.msra.mxu0 %v1840
      %v1842 = vand.u32 %v1380, 4294901760
      %v1843 = vsub.f32 %v1380, %v1842
      %v1844 = vand.u32 %v1843, 4294901760
      %v1845 = vsub.f32 %v1843, %v1844
      %v1846 = vand.u32 %v1845, 4294901760
      %1847 = vmatpush.msra.mxu0 %v1846
      %v1848 = vand.u32 %v1379, 4294901760
      %v1849 = vsub.f32 %v1379, %v1848
      %v1850 = vand.u32 %v1849, 4294901760
      %v1851 = vsub.f32 %v1849, %v1850
      %v1852 = vand.u32 %v1851, 4294901760
      %1853 = vmatpush.msra.mxu0 %v1852
      %v1854 = vand.u32 %v1378, 4294901760
      %v1855 = vsub.f32 %v1378, %v1854
      %v1856 = vand.u32 %v1855, 4294901760
      %v1857 = vsub.f32 %v1855, %v1856
      %v1858 = vand.u32 %v1857, 4294901760
      %1859 = vmatpush.msra.mxu0 %v1858
      %v1860 = vand.u32 %v1377, 4294901760
      %v1861 = vsub.f32 %v1377, %v1860
      %v1862 = vand.u32 %v1861, 4294901760
      %v1863 = vsub.f32 %v1861, %v1862
      %v1864 = vand.u32 %v1863, 4294901760
      %1865 = vmatpush.msra.mxu0 %v1864
      %v1866 = vand.u32 %v1376, 4294901760
      %v1867 = vsub.f32 %v1376, %v1866
      %v1868 = vand.u32 %v1867, 4294901760
      %v1869 = vsub.f32 %v1867, %v1868
      %v1870 = vand.u32 %v1869, 4294901760
      %1871 = vmatpush.msra.mxu0 %v1870
      %v1872 = vand.u32 %v1375, 4294901760
      %v1873 = vsub.f32 %v1375, %v1872
      %v1874 = vand.u32 %v1873, 4294901760
      %v1875 = vsub.f32 %v1873, %v1874
      %v1876 = vand.u32 %v1875, 4294901760
      %1877 = vmatpush.msra.mxu0 %v1876
      %v1878 = vand.u32 %v1374, 4294901760
      %v1879 = vsub.f32 %v1374, %v1878
      %v1880 = vand.u32 %v1879, 4294901760
      %v1881 = vsub.f32 %v1879, %v1880
      %v1882 = vand.u32 %v1881, 4294901760
      %1883 = vmatpush.msra.mxu0 %v1882
      %v1884 = vand.u32 %v1373, 4294901760
      %v1885 = vsub.f32 %v1373, %v1884
      %v1886 = vand.u32 %v1885, 4294901760
      %v1887 = vsub.f32 %v1885, %v1886
      %v1888 = vand.u32 %v1887, 4294901760
      %1889 = vmatpush.msra.mxu0 %v1888
      %v1890 = vand.u32 %v1372, 4294901760
      %v1891 = vsub.f32 %v1372, %v1890
      %v1892 = vand.u32 %v1891, 4294901760
      %v1893 = vsub.f32 %v1891, %v1892
      %v1894 = vand.u32 %v1893, 4294901760
      %1895 = vmatpush.msra.mxu0 %v1894
      %v1896 = vand.u32 %v1371, 4294901760
      %v1897 = vsub.f32 %v1371, %v1896
      %v1898 = vand.u32 %v1897, 4294901760
      %v1899 = vsub.f32 %v1897, %v1898
      %v1900 = vand.u32 %v1899, 4294901760
      %1901 = vmatpush.msra.mxu0 %v1900
      %v1902 = vand.u32 %v1370, 4294901760
      %v1903 = vsub.f32 %v1370, %v1902
      %v1904 = vand.u32 %v1903, 4294901760
      %v1905 = vsub.f32 %v1903, %v1904
      %v1906 = vand.u32 %v1905, 4294901760
      %1907 = vmatpush.msra.mxu0 %v1906
      %v1908 = vand.u32 %v1369, 4294901760
      %v1909 = vsub.f32 %v1369, %v1908
      %v1910 = vand.u32 %v1909, 4294901760
      %v1911 = vsub.f32 %v1909, %v1910
      %v1912 = vand.u32 %v1911, 4294901760
      %1913 = vmatpush.msra.mxu0 %v1912
      %v1914 = vand.u32 %v1368, 4294901760
      %v1915 = vsub.f32 %v1368, %v1914
      %v1916 = vand.u32 %v1915, 4294901760
      %v1917 = vsub.f32 %v1915, %v1916
      %v1918 = vand.u32 %v1917, 4294901760
      %1919 = vmatpush.msra.mxu0 %v1918
      %v1920 = vand.u32 %v1365, 4294901760
      %1921 = vmatmul.f32.gmra.mxu0 %v1920
      %v1922 = vpop.f32.mrf.mxu0
      %v1923 = vadd.f32 %v1814, %v1922
      %v1924 = vand.u32 %v1366, 4294901760
      %1925 = vmatmul.f32.gmra.mxu0 %v1924
      %v1926 = vpop.f32.mrf.mxu0
      %v1927 = vadd.f32 %v1822, %v1926
      %1928 = vdwg.mxu0
      %v1929 = vand.u32 %v1383, 4294901760
      %v1930 = vsub.f32 %v1383, %v1929
      %1931 = vmatpush.msra.mxu0 %v1930
      %v1932 = vand.u32 %v1382, 4294901760
      %v1933 = vsub.f32 %v1382, %v1932
      %1934 = vmatpush.msra.mxu0 %v1933
      %v1935 = vand.u32 %v1381, 4294901760
      %v1936 = vsub.f32 %v1381, %v1935
      %1937 = vmatpush.msra.mxu0 %v1936
      %v1938 = vand.u32 %v1380, 4294901760
      %v1939 = vsub.f32 %v1380, %v1938
      %1940 = vmatpush.msra.mxu0 %v1939
      %v1941 = vand.u32 %v1379, 4294901760
      %v1942 = vsub.f32 %v1379, %v1941
      %1943 = vmatpush.msra.mxu0 %v1942
      %v1944 = vand.u32 %v1378, 4294901760
      %v1945 = vsub.f32 %v1378, %v1944
      %1946 = vmatpush.msra.mxu0 %v1945
      %v1947 = vand.u32 %v1377, 4294901760
      %v1948 = vsub.f32 %v1377, %v1947
      %1949 = vmatpush.msra.mxu0 %v1948
      %v1950 = vand.u32 %v1376, 4294901760
      %v1951 = vsub.f32 %v1376, %v1950
      %1952 = vmatpush.msra.mxu0 %v1951
      %v1953 = vand.u32 %v1375, 4294901760
      %v1954 = vsub.f32 %v1375, %v1953
      %1955 = vmatpush.msra.mxu0 %v1954
      %v1956 = vand.u32 %v1374, 4294901760
      %v1957 = vsub.f32 %v1374, %v1956
      %1958 = vmatpush.msra.mxu0 %v1957
      %v1959 = vand.u32 %v1373, 4294901760
      %v1960 = vsub.f32 %v1373, %v1959
      %1961 = vmatpush.msra.mxu0 %v1960
      %v1962 = vand.u32 %v1372, 4294901760
      %v1963 = vsub.f32 %v1372, %v1962
      %1964 = vmatpush.msra.mxu0 %v1963
      %v1965 = vand.u32 %v1371, 4294901760
      %v1966 = vsub.f32 %v1371, %v1965
      %1967 = vmatpush.msra.mxu0 %v1966
      %v1968 = vand.u32 %v1370, 4294901760
      %v1969 = vsub.f32 %v1370, %v1968
      %1970 = vmatpush.msra.mxu0 %v1969
      %v1971 = vand.u32 %v1369, 4294901760
      %v1972 = vsub.f32 %v1369, %v1971
      %1973 = vmatpush.msra.mxu0 %v1972
      %v1974 = vand.u32 %v1368, 4294901760
      %v1975 = vsub.f32 %v1368, %v1974
      %1976 = vmatpush.msra.mxu0 %v1975
      %v1977 = vand.u32 %v1365, 4294901760
      %v1978 = vsub.f32 %v1365, %v1977
      %1979 = vmatmul.f32.gmra.mxu0 %v1978
      %v1980 = vpop.f32.mrf.mxu0
      %v1981 = vadd.f32 %v1923, %v1980
      %v1982 = vand.u32 %v1366, 4294901760
      %v1983 = vsub.f32 %v1366, %v1982
      %1984 = vmatmul.f32.gmra.mxu0 %v1983
      %v1985 = vpop.f32.mrf.mxu0
      %v1986 = vadd.f32 %v1927, %v1985
      %1987 = vdwg.mxu0
      %v1988 = vand.u32 %v1383, 4294901760
      %1989 = vmatpush.msra.mxu0 %v1988
      %v1990 = vand.u32 %v1382, 4294901760
      %1991 = vmatpush.msra.mxu0 %v1990
      %v1992 = vand.u32 %v1381, 4294901760
      %1993 = vmatpush.msra.mxu0 %v1992
      %v1994 = vand.u32 %v1380, 4294901760
      %1995 = vmatpush.msra.mxu0 %v1994
      %v1996 = vand.u32 %v1379, 4294901760
      %1997 = vmatpush.msra.mxu0 %v1996
      %v1998 = vand.u32 %v1378, 4294901760
      %1999 = vmatpush.msra.mxu0 %v1998
      %v2000 = vand.u32 %v1377, 4294901760
      %2001 = vmatpush.msra.mxu0 %v2000
      %v2002 = vand.u32 %v1376, 4294901760
      %2003 = vmatpush.msra.mxu0 %v2002
      %v2004 = vand.u32 %v1375, 4294901760
      %2005 = vmatpush.msra.mxu0 %v2004
      %v2006 = vand.u32 %v1374, 4294901760
      %2007 = vmatpush.msra.mxu0 %v2006
      %v2008 = vand.u32 %v1373, 4294901760
      %2009 = vmatpush.msra.mxu0 %v2008
      %v2010 = vand.u32 %v1372, 4294901760
      %2011 = vmatpush.msra.mxu0 %v2010
      %v2012 = vand.u32 %v1371, 4294901760
      %2013 = vmatpush.msra.mxu0 %v2012
      %v2014 = vand.u32 %v1370, 4294901760
      %2015 = vmatpush.msra.mxu0 %v2014
      %v2016 = vand.u32 %v1369, 4294901760
      %2017 = vmatpush.msra.mxu0 %v2016
      %v2018 = vand.u32 %v1368, 4294901760
      %2019 = vmatpush.msra.mxu0 %v2018
      %v2020 = vand.u32 %v1365, 4294901760
      %v2021 = vsub.f32 %v1365, %v2020
      %v2022 = vand.u32 %v2021, 4294901760
      %2023 = vmatmul.f32.gmra.mxu0 %v2022
      %v2024 = vpop.f32.mrf.mxu0
      %v2025 = vadd.f32 %v1981, %v2024
      %v2026 = vand.u32 %v1366, 4294901760
      %v2027 = vsub.f32 %v1366, %v2026
      %v2028 = vand.u32 %v2027, 4294901760
      %2029 = vmatmul.f32.gmra.mxu0 %v2028
      %v2030 = vpop.f32.mrf.mxu0
      %v2031 = vadd.f32 %v1986, %v2030
      %2032 = vdwg.mxu0
      %v2033 = vand.u32 %v1383, 4294901760
      %v2034 = vsub.f32 %v1383, %v2033
      %v2035 = vand.u32 %v2034, 4294901760
      %2036 = vmatpush.msra.mxu0 %v2035
      %v2037 = vand.u32 %v1382, 4294901760
      %v2038 = vsub.f32 %v1382, %v2037
      %v2039 = vand.u32 %v2038, 4294901760
      %2040 = vmatpush.msra.mxu0 %v2039
      %v2041 = vand.u32 %v1381, 4294901760
      %v2042 = vsub.f32 %v1381, %v2041
      %v2043 = vand.u32 %v2042, 4294901760
      %2044 = vmatpush.msra.mxu0 %v2043
      %v2045 = vand.u32 %v1380, 4294901760
      %v2046 = vsub.f32 %v1380, %v2045
      %v2047 = vand.u32 %v2046, 4294901760
      %2048 = vmatpush.msra.mxu0 %v2047
      %v2049 = vand.u32 %v1379, 4294901760
      %v2050 = vsub.f32 %v1379, %v2049
      %v2051 = vand.u32 %v2050, 4294901760
      %2052 = vmatpush.msra.mxu0 %v2051
      %v2053 = vand.u32 %v1378, 4294901760
      %v2054 = vsub.f32 %v1378, %v2053
      %v2055 = vand.u32 %v2054, 4294901760
      %2056 = vmatpush.msra.mxu0 %v2055
      %v2057 = vand.u32 %v1377, 4294901760
      %v2058 = vsub.f32 %v1377, %v2057
      %v2059 = vand.u32 %v2058, 4294901760
      %2060 = vmatpush.msra.mxu0 %v2059
      %v2061 = vand.u32 %v1376, 4294901760
      %v2062 = vsub.f32 %v1376, %v2061
      %v2063 = vand.u32 %v2062, 4294901760
      %2064 = vmatpush.msra.mxu0 %v2063
      %v2065 = vand.u32 %v1375, 4294901760
      %v2066 = vsub.f32 %v1375, %v2065
      %v2067 = vand.u32 %v2066, 4294901760
      %2068 = vmatpush.msra.mxu0 %v2067
      %v2069 = vand.u32 %v1374, 4294901760
      %v2070 = vsub.f32 %v1374, %v2069
      %v2071 = vand.u32 %v2070, 4294901760
      %2072 = vmatpush.msra.mxu0 %v2071
      %v2073 = vand.u32 %v1373, 4294901760
      %v2074 = vsub.f32 %v1373, %v2073
      %v2075 = vand.u32 %v2074, 4294901760
      %2076 = vmatpush.msra.mxu0 %v2075
      %v2077 = vand.u32 %v1372, 4294901760
      %v2078 = vsub.f32 %v1372, %v2077
      %v2079 = vand.u32 %v2078, 4294901760
      %2080 = vmatpush.msra.mxu0 %v2079
      %v2081 = vand.u32 %v1371, 4294901760
      %v2082 = vsub.f32 %v1371, %v2081
      %v2083 = vand.u32 %v2082, 4294901760
      %2084 = vmatpush.msra.mxu0 %v2083
      %v2085 = vand.u32 %v1370, 4294901760
      %v2086 = vsub.f32 %v1370, %v2085
      %v2087 = vand.u32 %v2086, 4294901760
      %2088 = vmatpush.msra.mxu0 %v2087
      %v2089 = vand.u32 %v1369, 4294901760
      %v2090 = vsub.f32 %v1369, %v2089
      %v2091 = vand.u32 %v2090, 4294901760
      %2092 = vmatpush.msra.mxu0 %v2091
      %v2093 = vand.u32 %v1368, 4294901760
      %v2094 = vsub.f32 %v1368, %v2093
      %v2095 = vand.u32 %v2094, 4294901760
      %2096 = vmatpush.msra.mxu0 %v2095
      %v2097 = vand.u32 %v1365, 4294901760
      %2098 = vmatmul.f32.gmra.mxu0 %v2097
      %v2099 = vpop.f32.mrf.mxu0
      %v2100 = vadd.f32 %v2025, %v2099
      %v2101 = vand.u32 %v1366, 4294901760
      %2102 = vmatmul.f32.gmra.mxu0 %v2101
      %v2103 = vpop.f32.mrf.mxu0
      %v2104 = vadd.f32 %v2031, %v2103
      %2105 = vdwg.mxu0
      %v2106 = vand.u32 %v1383, 4294901760
      %2107 = vmatpush.msra.mxu0 %v2106
      %v2108 = vand.u32 %v1382, 4294901760
      %2109 = vmatpush.msra.mxu0 %v2108
      %v2110 = vand.u32 %v1381, 4294901760
      %2111 = vmatpush.msra.mxu0 %v2110
      %v2112 = vand.u32 %v1380, 4294901760
      %2113 = vmatpush.msra.mxu0 %v2112
      %v2114 = vand.u32 %v1379, 4294901760
      %2115 = vmatpush.msra.mxu0 %v2114
      %v2116 = vand.u32 %v1378, 4294901760
      %2117 = vmatpush.msra.mxu0 %v2116
      %v2118 = vand.u32 %v1377, 4294901760
      %2119 = vmatpush.msra.mxu0 %v2118
      %v2120 = vand.u32 %v1376, 4294901760
      %2121 = vmatpush.msra.mxu0 %v2120
      %v2122 = vand.u32 %v1375, 4294901760
      %2123 = vmatpush.msra.mxu0 %v2122
      %v2124 = vand.u32 %v1374, 4294901760
      %2125 = vmatpush.msra.mxu0 %v2124
      %v2126 = vand.u32 %v1373, 4294901760
      %2127 = vmatpush.msra.mxu0 %v2126
      %v2128 = vand.u32 %v1372, 4294901760
      %2129 = vmatpush.msra.mxu0 %v2128
      %v2130 = vand.u32 %v1371, 4294901760
      %2131 = vmatpush.msra.mxu0 %v2130
      %v2132 = vand.u32 %v1370, 4294901760
      %2133 = vmatpush.msra.mxu0 %v2132
      %v2134 = vand.u32 %v1369, 4294901760
      %2135 = vmatpush.msra.mxu0 %v2134
      %v2136 = vand.u32 %v1368, 4294901760
      %2137 = vmatpush.msra.mxu0 %v2136
      %v2138 = vand.u32 %v1365, 4294901760
      %2139 = vmatmul.f32.gmra.mxu0 %v2138
      %v2140 = vpop.f32.mrf.mxu0
      %v2141 = vadd.f32 %v2100, %v2140
      %v2142 = vand.u32 %v1366, 4294901760
      %2143 = vmatmul.f32.gmra.mxu0 %v2142
      %v2144 = vpop.f32.mrf.mxu0
      %v2145 = vadd.f32 %v2104, %v2144
      %2146 = vdwg.mxu0
      %v2147 = vld [vmem:[#allocation2 + $0x9] sm:$0xff]
      %v2148 = vld [vmem:[#allocation2 + $0x11] sm:$0xff]
      %s2149 = scalar_lea.vmem %s1, 640
      %v2150 = vld [vmem:[%s2149] sm:$0xff]
      %v2151 = vld [vmem:[%s2149 + $0x8] sm:$0xff]
      %v2152 = vld [vmem:[%s2149 + $0x10] sm:$0xff]
      %v2153 = vld [vmem:[%s2149 + $0x18] sm:$0xff]
      %v2154 = vld [vmem:[%s2149 + $0x20] sm:$0xff]
      %v2155 = vld [vmem:[%s2149 + $0x28] sm:$0xff]
      %v2156 = vld [vmem:[%s2149 + $0x30] sm:$0xff]
      %v2157 = vld [vmem:[%s2149 + $0x38] sm:$0xff]
      %v2158 = vld [vmem:[%s2149 + $0x40] sm:$0xff]
      %v2159 = vld [vmem:[%s2149 + $0x48] sm:$0xff]
      %v2160 = vld [vmem:[%s2149 + $0x50] sm:$0xff]
      %v2161 = vld [vmem:[%s2149 + $0x58] sm:$0xff]
      %v2162 = vld [vmem:[%s2149 + $0x60] sm:$0xff]
      %v2163 = vld [vmem:[%s2149 + $0x68] sm:$0xff]
      %v2164 = vld [vmem:[%s2149 + $0x70] sm:$0xff]
      %v2165 = vld [vmem:[%s2149 + $0x78] sm:$0xff]
      %v2166 = vand.u32 %v2165, 4294901760
      %2167 = vmatpush.msra.mxu0 %v2166
      %v2168 = vand.u32 %v2164, 4294901760
      %2169 = vmatpush.msra.mxu0 %v2168
      %v2170 = vand.u32 %v2163, 4294901760
      %2171 = vmatpush.msra.mxu0 %v2170
      %v2172 = vand.u32 %v2162, 4294901760
      %2173 = vmatpush.msra.mxu0 %v2172
      %v2174 = vand.u32 %v2161, 4294901760
      %2175 = vmatpush.msra.mxu0 %v2174
      %v2176 = vand.u32 %v2160, 4294901760
      %2177 = vmatpush.msra.mxu0 %v2176
      %v2178 = vand.u32 %v2159, 4294901760
      %2179 = vmatpush.msra.mxu0 %v2178
      %v2180 = vand.u32 %v2158, 4294901760
      %2181 = vmatpush.msra.mxu0 %v2180
      %v2182 = vand.u32 %v2157, 4294901760
      %2183 = vmatpush.msra.mxu0 %v2182
      %v2184 = vand.u32 %v2156, 4294901760
      %2185 = vmatpush.msra.mxu0 %v2184
      %v2186 = vand.u32 %v2155, 4294901760
      %2187 = vmatpush.msra.mxu0 %v2186
      %v2188 = vand.u32 %v2154, 4294901760
      %2189 = vmatpush.msra.mxu0 %v2188
      %v2190 = vand.u32 %v2153, 4294901760
      %2191 = vmatpush.msra.mxu0 %v2190
      %v2192 = vand.u32 %v2152, 4294901760
      %2193 = vmatpush.msra.mxu0 %v2192
      %v2194 = vand.u32 %v2151, 4294901760
      %2195 = vmatpush.msra.mxu0 %v2194
      %v2196 = vand.u32 %v2150, 4294901760
      %2197 = vmatpush.msra.mxu0 %v2196
      %v2198 = vand.u32 %v2147, 4294901760
      %v2199 = vsub.f32 %v2147, %v2198
      %v2200 = vand.u32 %v2199, 4294901760
      %v2201 = vsub.f32 %v2199, %v2200
      %v2202 = vand.u32 %v2201, 4294901760
      %2203 = vmatmul.f32.gmra.mxu0 %v2202
      %v2204 = vpop.f32.mrf.mxu0
      %v2205 = vadd.f32 0.0, %v2204
      %v2206 = vand.u32 %v2148, 4294901760
      %v2207 = vsub.f32 %v2148, %v2206
      %v2208 = vand.u32 %v2207, 4294901760
      %v2209 = vsub.f32 %v2207, %v2208
      %v2210 = vand.u32 %v2209, 4294901760
      %2211 = vmatmul.f32.gmra.mxu0 %v2210
      %v2212 = vpop.f32.mrf.mxu0
      %v2213 = vadd.f32 0.0, %v2212
      %2214 = vdwg.mxu0
      %v2215 = vand.u32 %v2165, 4294901760
      %v2216 = vsub.f32 %v2165, %v2215
      %v2217 = vand.u32 %v2216, 4294901760
      %v2218 = vsub.f32 %v2216, %v2217
      %v2219 = vand.u32 %v2218, 4294901760
      %2220 = vmatpush.msra.mxu0 %v2219
      %v2221 = vand.u32 %v2164, 4294901760
      %v2222 = vsub.f32 %v2164, %v2221
      %v2223 = vand.u32 %v2222, 4294901760
      %v2224 = vsub.f32 %v2222, %v2223
      %v2225 = vand.u32 %v2224, 4294901760
      %2226 = vmatpush.msra.mxu0 %v2225
      %v2227 = vand.u32 %v2163, 4294901760
      %v2228 = vsub.f32 %v2163, %v2227
      %v2229 = vand.u32 %v2228, 4294901760
      %v2230 = vsub.f32 %v2228, %v2229
      %v2231 = vand.u32 %v2230, 4294901760
      %2232 = vmatpush.msra.mxu0 %v2231
      %v2233 = vand.u32 %v2162, 4294901760
      %v2234 = vsub.f32 %v2162, %v2233
      %v2235 = vand.u32 %v2234, 4294901760
      %v2236 = vsub.f32 %v2234, %v2235
      %v2237 = vand.u32 %v2236, 4294901760
      %2238 = vmatpush.msra.mxu0 %v2237
      %v2239 = vand.u32 %v2161, 4294901760
      %v2240 = vsub.f32 %v2161, %v2239
      %v2241 = vand.u32 %v2240, 4294901760
      %v2242 = vsub.f32 %v2240, %v2241
      %v2243 = vand.u32 %v2242, 4294901760
      %2244 = vmatpush.msra.mxu0 %v2243
      %v2245 = vand.u32 %v2160, 4294901760
      %v2246 = vsub.f32 %v2160, %v2245
      %v2247 = vand.u32 %v2246, 4294901760
      %v2248 = vsub.f32 %v2246, %v2247
      %v2249 = vand.u32 %v2248, 4294901760
      %2250 = vmatpush.msra.mxu0 %v2249
      %v2251 = vand.u32 %v2159, 4294901760
      %v2252 = vsub.f32 %v2159, %v2251
      %v2253 = vand.u32 %v2252, 4294901760
      %v2254 = vsub.f32 %v2252, %v2253
      %v2255 = vand.u32 %v2254, 4294901760
      %2256 = vmatpush.msra.mxu0 %v2255
      %v2257 = vand.u32 %v2158, 4294901760
      %v2258 = vsub.f32 %v2158, %v2257
      %v2259 = vand.u32 %v2258, 4294901760
      %v2260 = vsub.f32 %v2258, %v2259
      %v2261 = vand.u32 %v2260, 4294901760
      %2262 = vmatpush.msra.mxu0 %v2261
      %v2263 = vand.u32 %v2157, 4294901760
      %v2264 = vsub.f32 %v2157, %v2263
      %v2265 = vand.u32 %v2264, 4294901760
      %v2266 = vsub.f32 %v2264, %v2265
      %v2267 = vand.u32 %v2266, 4294901760
      %2268 = vmatpush.msra.mxu0 %v2267
      %v2269 = vand.u32 %v2156, 4294901760
      %v2270 = vsub.f32 %v2156, %v2269
      %v2271 = vand.u32 %v2270, 4294901760
      %v2272 = vsub.f32 %v2270, %v2271
      %v2273 = vand.u32 %v2272, 4294901760
      %2274 = vmatpush.msra.mxu0 %v2273
      %v2275 = vand.u32 %v2155, 4294901760
      %v2276 = vsub.f32 %v2155, %v2275
      %v2277 = vand.u32 %v2276, 4294901760
      %v2278 = vsub.f32 %v2276, %v2277
      %v2279 = vand.u32 %v2278, 4294901760
      %2280 = vmatpush.msra.mxu0 %v2279
      %v2281 = vand.u32 %v2154, 4294901760
      %v2282 = vsub.f32 %v2154, %v2281
      %v2283 = vand.u32 %v2282, 4294901760
      %v2284 = vsub.f32 %v2282, %v2283
      %v2285 = vand.u32 %v2284, 4294901760
      %2286 = vmatpush.msra.mxu0 %v2285
      %v2287 = vand.u32 %v2153, 4294901760
      %v2288 = vsub.f32 %v2153, %v2287
      %v2289 = vand.u32 %v2288, 4294901760
      %v2290 = vsub.f32 %v2288, %v2289
      %v2291 = vand.u32 %v2290, 4294901760
      %2292 = vmatpush.msra.mxu0 %v2291
      %v2293 = vand.u32 %v2152, 4294901760
      %v2294 = vsub.f32 %v2152, %v2293
      %v2295 = vand.u32 %v2294, 4294901760
      %v2296 = vsub.f32 %v2294, %v2295
      %v2297 = vand.u32 %v2296, 4294901760
      %2298 = vmatpush.msra.mxu0 %v2297
      %v2299 = vand.u32 %v2151, 4294901760
      %v2300 = vsub.f32 %v2151, %v2299
      %v2301 = vand.u32 %v2300, 4294901760
      %v2302 = vsub.f32 %v2300, %v2301
      %v2303 = vand.u32 %v2302, 4294901760
      %2304 = vmatpush.msra.mxu0 %v2303
      %v2305 = vand.u32 %v2150, 4294901760
      %v2306 = vsub.f32 %v2150, %v2305
      %v2307 = vand.u32 %v2306, 4294901760
      %v2308 = vsub.f32 %v2306, %v2307
      %v2309 = vand.u32 %v2308, 4294901760
      %2310 = vmatpush.msra.mxu0 %v2309
      %v2311 = vand.u32 %v2147, 4294901760
      %2312 = vmatmul.f32.gmra.mxu0 %v2311
      %v2313 = vpop.f32.mrf.mxu0
      %v2314 = vadd.f32 %v2205, %v2313
      %v2315 = vand.u32 %v2148, 4294901760
      %2316 = vmatmul.f32.gmra.mxu0 %v2315
      %v2317 = vpop.f32.mrf.mxu0
      %v2318 = vadd.f32 %v2213, %v2317
      %2319 = vdwg.mxu0
      %v2320 = vand.u32 %v2165, 4294901760
      %v2321 = vsub.f32 %v2165, %v2320
      %2322 = vmatpush.msra.mxu0 %v2321
      %v2323 = vand.u32 %v2164, 4294901760
      %v2324 = vsub.f32 %v2164, %v2323
      %2325 = vmatpush.msra.mxu0 %v2324
      %v2326 = vand.u32 %v2163, 4294901760
      %v2327 = vsub.f32 %v2163, %v2326
      %2328 = vmatpush.msra.mxu0 %v2327
      %v2329 = vand.u32 %v2162, 4294901760
      %v2330 = vsub.f32 %v2162, %v2329
      %2331 = vmatpush.msra.mxu0 %v2330
      %v2332 = vand.u32 %v2161, 4294901760
      %v2333 = vsub.f32 %v2161, %v2332
      %2334 = vmatpush.msra.mxu0 %v2333
      %v2335 = vand.u32 %v2160, 4294901760
      %v2336 = vsub.f32 %v2160, %v2335
      %2337 = vmatpush.msra.mxu0 %v2336
      %v2338 = vand.u32 %v2159, 4294901760
      %v2339 = vsub.f32 %v2159, %v2338
      %2340 = vmatpush.msra.mxu0 %v2339
      %v2341 = vand.u32 %v2158, 4294901760
      %v2342 = vsub.f32 %v2158, %v2341
      %2343 = vmatpush.msra.mxu0 %v2342
      %v2344 = vand.u32 %v2157, 4294901760
      %v2345 = vsub.f32 %v2157, %v2344
      %2346 = vmatpush.msra.mxu0 %v2345
      %v2347 = vand.u32 %v2156, 4294901760
      %v2348 = vsub.f32 %v2156, %v2347
      %2349 = vmatpush.msra.mxu0 %v2348
      %v2350 = vand.u32 %v2155, 4294901760
      %v2351 = vsub.f32 %v2155, %v2350
      %2352 = vmatpush.msra.mxu0 %v2351
      %v2353 = vand.u32 %v2154, 4294901760
      %v2354 = vsub.f32 %v2154, %v2353
      %2355 = vmatpush.msra.mxu0 %v2354
      %v2356 = vand.u32 %v2153, 4294901760
      %v2357 = vsub.f32 %v2153, %v2356
      %2358 = vmatpush.msra.mxu0 %v2357
      %v2359 = vand.u32 %v2152, 4294901760
      %v2360 = vsub.f32 %v2152, %v2359
      %2361 = vmatpush.msra.mxu0 %v2360
      %v2362 = vand.u32 %v2151, 4294901760
      %v2363 = vsub.f32 %v2151, %v2362
      %2364 = vmatpush.msra.mxu0 %v2363
      %v2365 = vand.u32 %v2150, 4294901760
      %v2366 = vsub.f32 %v2150, %v2365
      %2367 = vmatpush.msra.mxu0 %v2366
      %v2368 = vand.u32 %v2147, 4294901760
      %v2369 = vsub.f32 %v2147, %v2368
      %2370 = vmatmul.f32.gmra.mxu0 %v2369
      %v2371 = vpop.f32.mrf.mxu0
      %v2372 = vadd.f32 %v2314, %v2371
      %v2373 = vand.u32 %v2148, 4294901760
      %v2374 = vsub.f32 %v2148, %v2373
      %2375 = vmatmul.f32.gmra.mxu0 %v2374
      %v2376 = vpop.f32.mrf.mxu0
      %v2377 = vadd.f32 %v2318, %v2376
      %2378 = vdwg.mxu0
      %v2379 = vand.u32 %v2165, 4294901760
      %2380 = vmatpush.msra.mxu0 %v2379
      %v2381 = vand.u32 %v2164, 4294901760
      %2382 = vmatpush.msra.mxu0 %v2381
      %v2383 = vand.u32 %v2163, 4294901760
      %2384 = vmatpush.msra.mxu0 %v2383
      %v2385 = vand.u32 %v2162, 4294901760
      %2386 = vmatpush.msra.mxu0 %v2385
      %v2387 = vand.u32 %v2161, 4294901760
      %2388 = vmatpush.msra.mxu0 %v2387
      %v2389 = vand.u32 %v2160, 4294901760
      %2390 = vmatpush.msra.mxu0 %v2389
      %v2391 = vand.u32 %v2159, 4294901760
      %2392 = vmatpush.msra.mxu0 %v2391
      %v2393 = vand.u32 %v2158, 4294901760
      %2394 = vmatpush.msra.mxu0 %v2393
      %v2395 = vand.u32 %v2157, 4294901760
      %2396 = vmatpush.msra.mxu0 %v2395
      %v2397 = vand.u32 %v2156, 4294901760
      %2398 = vmatpush.msra.mxu0 %v2397
      %v2399 = vand.u32 %v2155, 4294901760
      %2400 = vmatpush.msra.mxu0 %v2399
      %v2401 = vand.u32 %v2154, 4294901760
      %2402 = vmatpush.msra.mxu0 %v2401
      %v2403 = vand.u32 %v2153, 4294901760
      %2404 = vmatpush.msra.mxu0 %v2403
      %v2405 = vand.u32 %v2152, 4294901760
      %2406 = vmatpush.msra.mxu0 %v2405
      %v2407 = vand.u32 %v2151, 4294901760
      %2408 = vmatpush.msra.mxu0 %v2407
      %v2409 = vand.u32 %v2150, 4294901760
      %2410 = vmatpush.msra.mxu0 %v2409
      %v2411 = vand.u32 %v2147, 4294901760
      %v2412 = vsub.f32 %v2147, %v2411
      %v2413 = vand.u32 %v2412, 4294901760
      %2414 = vmatmul.f32.gmra.mxu0 %v2413
      %v2415 = vpop.f32.mrf.mxu0
      %v2416 = vadd.f32 %v2372, %v2415
      %v2417 = vand.u32 %v2148, 4294901760
      %v2418 = vsub.f32 %v2148, %v2417
      %v2419 = vand.u32 %v2418, 4294901760
      %2420 = vmatmul.f32.gmra.mxu0 %v2419
      %v2421 = vpop.f32.mrf.mxu0
      %v2422 = vadd.f32 %v2377, %v2421
      %2423 = vdwg.mxu0
      %v2424 = vand.u32 %v2165, 4294901760
      %v2425 = vsub.f32 %v2165, %v2424
      %v2426 = vand.u32 %v2425, 4294901760
      %2427 = vmatpush.msra.mxu0 %v2426
      %v2428 = vand.u32 %v2164, 4294901760
      %v2429 = vsub.f32 %v2164, %v2428
      %v2430 = vand.u32 %v2429, 4294901760
      %2431 = vmatpush.msra.mxu0 %v2430
      %v2432 = vand.u32 %v2163, 4294901760
      %v2433 = vsub.f32 %v2163, %v2432
      %v2434 = vand.u32 %v2433, 4294901760
      %2435 = vmatpush.msra.mxu0 %v2434
      %v2436 = vand.u32 %v2162, 4294901760
      %v2437 = vsub.f32 %v2162, %v2436
      %v2438 = vand.u32 %v2437, 4294901760
      %2439 = vmatpush.msra.mxu0 %v2438
      %v2440 = vand.u32 %v2161, 4294901760
      %v2441 = vsub.f32 %v2161, %v2440
      %v2442 = vand.u32 %v2441, 4294901760
      %2443 = vmatpush.msra.mxu0 %v2442
      %v2444 = vand.u32 %v2160, 4294901760
      %v2445 = vsub.f32 %v2160, %v2444
      %v2446 = vand.u32 %v2445, 4294901760
      %2447 = vmatpush.msra.mxu0 %v2446
      %v2448 = vand.u32 %v2159, 4294901760
      %v2449 = vsub.f32 %v2159, %v2448
      %v2450 = vand.u32 %v2449, 4294901760
      %2451 = vmatpush.msra.mxu0 %v2450
      %v2452 = vand.u32 %v2158, 4294901760
      %v2453 = vsub.f32 %v2158, %v2452
      %v2454 = vand.u32 %v2453, 4294901760
      %2455 = vmatpush.msra.mxu0 %v2454
      %v2456 = vand.u32 %v2157, 4294901760
      %v2457 = vsub.f32 %v2157, %v2456
      %v2458 = vand.u32 %v2457, 4294901760
      %2459 = vmatpush.msra.mxu0 %v2458
      %v2460 = vand.u32 %v2156, 4294901760
      %v2461 = vsub.f32 %v2156, %v2460
      %v2462 = vand.u32 %v2461, 4294901760
      %2463 = vmatpush.msra.mxu0 %v2462
      %v2464 = vand.u32 %v2155, 4294901760
      %v2465 = vsub.f32 %v2155, %v2464
      %v2466 = vand.u32 %v2465, 4294901760
      %2467 = vmatpush.msra.mxu0 %v2466
      %v2468 = vand.u32 %v2154, 4294901760
      %v2469 = vsub.f32 %v2154, %v2468
      %v2470 = vand.u32 %v2469, 4294901760
      %2471 = vmatpush.msra.mxu0 %v2470
      %v2472 = vand.u32 %v2153, 4294901760
      %v2473 = vsub.f32 %v2153, %v2472
      %v2474 = vand.u32 %v2473, 4294901760
      %2475 = vmatpush.msra.mxu0 %v2474
      %v2476 = vand.u32 %v2152, 4294901760
      %v2477 = vsub.f32 %v2152, %v2476
      %v2478 = vand.u32 %v2477, 4294901760
      %2479 = vmatpush.msra.mxu0 %v2478
      %v2480 = vand.u32 %v2151, 4294901760
      %v2481 = vsub.f32 %v2151, %v2480
      %v2482 = vand.u32 %v2481, 4294901760
      %2483 = vmatpush.msra.mxu0 %v2482
      %v2484 = vand.u32 %v2150, 4294901760
      %v2485 = vsub.f32 %v2150, %v2484
      %v2486 = vand.u32 %v2485, 4294901760
      %2487 = vmatpush.msra.mxu0 %v2486
      %v2488 = vand.u32 %v2147, 4294901760
      %2489 = vmatmul.f32.gmra.mxu0 %v2488
      %v2490 = vpop.f32.mrf.mxu0
      %v2491 = vadd.f32 %v2416, %v2490
      %v2492 = vand.u32 %v2148, 4294901760
      %2493 = vmatmul.f32.gmra.mxu0 %v2492
      %v2494 = vpop.f32.mrf.mxu0
      %v2495 = vadd.f32 %v2422, %v2494
      %2496 = vdwg.mxu0
      %v2497 = vand.u32 %v2165, 4294901760
      %2498 = vmatpush.msra.mxu0 %v2497
      %v2499 = vand.u32 %v2164, 4294901760
      %2500 = vmatpush.msra.mxu0 %v2499
      %v2501 = vand.u32 %v2163, 4294901760
      %2502 = vmatpush.msra.mxu0 %v2501
      %v2503 = vand.u32 %v2162, 4294901760
      %2504 = vmatpush.msra.mxu0 %v2503
      %v2505 = vand.u32 %v2161, 4294901760
      %2506 = vmatpush.msra.mxu0 %v2505
      %v2507 = vand.u32 %v2160, 4294901760
      %2508 = vmatpush.msra.mxu0 %v2507
      %v2509 = vand.u32 %v2159, 4294901760
      %2510 = vmatpush.msra.mxu0 %v2509
      %v2511 = vand.u32 %v2158, 4294901760
      %2512 = vmatpush.msra.mxu0 %v2511
      %v2513 = vand.u32 %v2157, 4294901760
      %2514 = vmatpush.msra.mxu0 %v2513
      %v2515 = vand.u32 %v2156, 4294901760
      %2516 = vmatpush.msra.mxu0 %v2515
      %v2517 = vand.u32 %v2155, 4294901760
      %2518 = vmatpush.msra.mxu0 %v2517
      %v2519 = vand.u32 %v2154, 4294901760
      %2520 = vmatpush.msra.mxu0 %v2519
      %v2521 = vand.u32 %v2153, 4294901760
      %2522 = vmatpush.msra.mxu0 %v2521
      %v2523 = vand.u32 %v2152, 4294901760
      %2524 = vmatpush.msra.mxu0 %v2523
      %v2525 = vand.u32 %v2151, 4294901760
      %2526 = vmatpush.msra.mxu0 %v2525
      %v2527 = vand.u32 %v2150, 4294901760
      %2528 = vmatpush.msra.mxu0 %v2527
      %v2529 = vand.u32 %v2147, 4294901760
      %2530 = vmatmul.f32.gmra.mxu0 %v2529
      %v2531 = vpop.f32.mrf.mxu0
      %v2532 = vadd.f32 %v2491, %v2531
      %v2533 = vand.u32 %v2148, 4294901760
      %2534 = vmatmul.f32.gmra.mxu0 %v2533
      %v2535 = vpop.f32.mrf.mxu0
      %v2536 = vadd.f32 %v2495, %v2535
      %2537 = vdwg.mxu0
      %v2538 = vadd.f32 %v2141, %v2532
      %v2539 = vadd.f32 %v2145, %v2536
      %s2540 = scalar_lea.vmem %s2, 1
      %v2541 = vld [vmem:[%s2540] sm:$0x1]
      %v2543 = vperm.slane %v2541, 0
      %v2545 = vadd.f32 %v2538, %v2543
      %v2546 = vadd.f32 %v2539, %v2543
      %vm2547 = vcmp.ge.f32.partialorder %v2545, 0.0
      %vm2548 = vcmp.ge.f32.partialorder %v2546, 0.0
      %v2549 = vmul.f32 %v2545, 0.01
      %v2550 = vmul.f32 %v2546, 0.01
      %v2551 = vsel %vm2547, %v2545, %v2549
      %v2552 = vsel %vm2548, %v2546, %v2550
      %2553 = vst [vmem:[%s170] sm:$0xff] %v2551
      %2554 = vst [vmem:[%s170 + $0x8] sm:$0xff] %v2552
      %p2555 = scmp.lt.s32.totalorder %s14, 1
      %s2556 = scalar_select %p2555, %s14, 1
      %s2557 = smul.addr %s2556, 2
      %s2558 = smul.addr %s2557, 8
      %s2559 = scalar_lea.vmem %s3, %s2558
      // Predicated region
      $region33: #{stacked_conv_layers.1} parent=31 // pred_check
        %p2560 = pneg %p100
      $region34: #{stacked_conv_layers.1} parent=31 // pred_check_branch
        %2562 = sbr.rel (%p2560) target = $region36
      $region35: #{stacked_conv_layers.1} parent=31 // pred_region
        _
      $region36: #{stacked_conv_layers.1} parent=31 // pred_fallthru
        _
    $region32: #{stacked_conv_layers.1} parent=5 // pred_fallthru
      _
    %p2563 = scmp.le.s32.totalorder 2, %s9
    // Predicated region
    $region37: #{stacked_conv_layers.1} parent=5 // pred_check
      %p2564 = pneg %p2563
    $region38: #{stacked_conv_layers.1} parent=5 // pred_check_branch
      %2566 = sbr.rel (%p2564) target = $region40
    $region39: #{stacked_conv_layers.1} parent=5 // pred_region
      %s2567 = ssub.s32 %s9, 2
      // Predicated region
      $region41: #{stacked_conv_layers.1} parent=39 // pred_check
        %p2568 = pneg %p106
      $region42: #{stacked_conv_layers.1} parent=39 // pred_check_branch
        %2570 = sbr.rel (%p2568) target = $region44
      $region43: #{stacked_conv_layers.1} parent=39 // pred_region
        %p2571 = scmp.lt.s32.totalorder %s15, 1
        %s2572 = scalar_select %p2571, %s15, 1
        %s2573 = smul.addr %s2572, 2
        %s2574 = smul.addr %s2573, 8
        %s2575 = scalar_lea.vmem %s3, %s2574
      $region44: #{stacked_conv_layers.1} parent=39 // pred_fallthru
        _
    $region40: #{stacked_conv_layers.1} parent=5 // pred_fallthru
      _
  $region6: #{stacked_conv_layers.1} parent=0 // loop_footer
    %s13 = sadd.s32 1, %s9
  $region7: #{stacked_conv_layers.1} parent=0 // loop_footer_branch
    %8 = sbr.rel target = $region3
  $region8: #{stacked_conv_layers.1} parent=0 // loop_exit
    _

</llo_original>
